<compile_context>
chip_gen: v7x
topology: tpu7x:2x2x1
jax: 0.10.0
libtpu: 0.0.40
codegen_flags: <defaults>
</compile_context>

<pallas_src>
import functools

import jax
import jax.numpy as jnp
from jax.experimental import pallas as pl
from jax.experimental.pallas import tpu as pltpu

LRELU_SLOPE = 0.2
EPS = 1e-5
# (norm, activation) per conv layer of MaskNet.
LAYER_CFG = (("instance", "lrelu"), ("instance", "lrelu"), (None, None))


def _round_up(x, m):
    return (x + m - 1) // m * m


# --------------------------------------------------------------------------
# Fused Pallas kernel: bf16 matmul (f32 acc) + bias + InstanceNorm + LeakyReLU
# --------------------------------------------------------------------------
def _conv_fused_kernel(p_ref, w_ref, b_ref, o_ref, *, norm, act, hw_valid):
    p = p_ref[0]          # (HWp, Kp) bf16 : im2col patches of one sample
    w = w_ref[...]        # (Kp, Np)  bf16 : conv weights as a matmul
    y = jnp.dot(p, w, preferred_element_type=jnp.float32) + b_ref[...]

    if norm == "instance":
        hwp = y.shape[0]
        if hw_valid == hwp:
            mean = jnp.mean(y, axis=0, keepdims=True)
            var = jnp.mean((y - mean) ** 2, axis=0, keepdims=True)
        else:
            # Spatial axis was padded: mask padded rows out of the statistics.
            row = jax.lax.broadcasted_iota(jnp.int32, (hwp, 1), 0)
            msk = (row < hw_valid).astype(jnp.float32)
            inv = 1.0 / float(hw_valid)
            mean = jnp.sum(y * msk, axis=0, keepdims=True) * inv
            var = jnp.sum(((y - mean) ** 2) * msk, axis=0, keepdims=True) * inv
        y = (y - mean) * jax.lax.rsqrt(var + EPS)

    if act == "lrelu":
        y = jnp.where(y > 0, y, LRELU_SLOPE * y)

    o_ref[0] = y.astype(o_ref.dtype)


# --------------------------------------------------------------------------
# Plain-JAX glue
# --------------------------------------------------------------------------
def im2col_3x3_s1(x_nhwc):
    """3x3 / stride 1 / pad 1 patches: (B,H,W,C) -> (B, H*W, 9*C), (dy,dx,cin) order."""
    B, H, W, C = x_nhwc.shape
    xp = jnp.pad(x_nhwc, ((0, 0), (1, 1), (1, 1), (0, 0)))
    cols = []
    for dy in range(3):
        for dx in range(3):
            cols.append(xp[:, dy:dy + H, dx:dx + W, :])
    patches = jnp.concatenate(cols, axis=-1)
    return patches.reshape(B, H * W, 9 * C)


def conv_layer_pallas(x_nhwc, w, b, *, norm, act):
    """Fused conv3x3(s1,p1) + bias [+ InstanceNorm + LeakyReLU]. Returns NHWC f32."""
    B, H, W, C = x_nhwc.shape
    cout = w.shape[1]
    HW = H * W
    K = 9 * C

    HWp = _round_up(HW, 8)
    Kp = _round_up(K, 128)     # lane-dense contraction dim
    Np = _round_up(cout, 128)  # lane-dense output stores (unmasked vst)

    patches = im2col_3x3_s1(x_nhwc)
    # TODO(synk): im2col patches are still materialized by XLA in HBM; for large
    # feature maps move the 9 shifted slices into the kernel (overlapping
    # windows / allow_input_fusion on operand 0) to kill that round trip.
    pp = jnp.pad(patches, ((0, 0), (0, HWp - HW), (0, Kp - K))).astype(jnp.bfloat16)
    wp = jnp.pad(w, ((0, Kp - K), (0, Np - cout))).astype(jnp.bfloat16)
    bp = jnp.pad(b, (0, Np - cout)).reshape(1, Np).astype(jnp.float32)

    kern = functools.partial(_conv_fused_kernel, norm=norm, act=act, hw_valid=HW)
    out = pl.pallas_call(
        kern,
        out_shape=jax.ShapeDtypeStruct((B, HWp, Np), jnp.float32),
        grid_spec=pltpu.PrefetchScalarGridSpec(
            num_scalar_prefetch=0,
            grid=(B,),
            in_specs=[
                pl.BlockSpec((1, HWp, Kp), lambda bi: (bi, 0, 0)),
                pl.BlockSpec((Kp, Np), lambda bi: (0, 0)),
                pl.BlockSpec((1, Np), lambda bi: (0, 0)),
            ],
            out_specs=pl.BlockSpec((1, HWp, Np), lambda bi: (bi, 0, 0)),
        ),
        compiler_params=pltpu.CompilerParams(
            dimension_semantics=("parallel",),
        ),
    )(pp, wp, bp)
    return out[:, :HW, :cout].reshape(B, H, W, cout)


def masknet_forward(params, x_nchw):
    x = jnp.transpose(x_nchw, (0, 2, 3, 1)).astype(jnp.float32)   # NCHW -> NHWC
    for (norm, act), lp in zip(LAYER_CFG, params["convs"]):
        x = conv_layer_pallas(x, lp["w"], lp["b"], norm=norm, act=act)
    return jnp.transpose(x, (0, 3, 1, 2))                          # NHWC -> NCHW


def masknet_ref(params, x_nchw):
    """Plain-JAX reference using the same bf16 matmul inputs / f32 accumulation."""
    x = jnp.transpose(x_nchw, (0, 2, 3, 1)).astype(jnp.float32)
    for (norm, act), lp in zip(LAYER_CFG, params["convs"]):
        B, H, W, _ = x.shape
        patches = im2col_3x3_s1(x).astype(jnp.bfloat16)
        y = jnp.einsum("bmk,kn->bmn", patches, lp["w"].astype(jnp.bfloat16),
                       preferred_element_type=jnp.float32) + lp["b"]
        if norm == "instance":
            mean = jnp.mean(y, axis=1, keepdims=True)
            var = jnp.mean((y - mean) ** 2, axis=1, keepdims=True)
            y = (y - mean) * jax.lax.rsqrt(var + EPS)
        if act == "lrelu":
            y = jnp.where(y > 0, y, LRELU_SLOPE * y)
        x = y.reshape(B, H, W, -1)
    return jnp.transpose(x, (0, 3, 1, 2))


def init_masknet_params(key, in_channel):
    convs = []
    cin = in_channel
    for cout in (in_channel, in_channel, 1):
        key, kw, kb = jax.random.split(key, 3)
        w = jax.random.normal(kw, (9 * cin, cout), jnp.float32) / jnp.sqrt(9 * cin)
        b = 0.01 * jax.random.normal(kb, (cout,), jnp.float32)
        convs.append({"w": w, "b": b})
        cin = cout
    return {"convs": convs}


if __name__ == "__main__":
    B, C, H, W = 2, 32, 16, 16
    key = jax.random.PRNGKey(0)
    kx, kp = jax.random.split(key)
    x = jax.random.normal(kx, (B, C, H, W), jnp.float32)
    params = init_masknet_params(kp, C)

    fwd = jax.jit(masknet_forward)
    out = jax.block_until_ready(fwd(params, x))
    assert out.shape == (B, 1, H, W), out.shape
    assert bool(jnp.all(jnp.isfinite(out)))

    ref = masknet_ref(params, x)
    assert jnp.allclose(out, ref, atol=5e-2, rtol=5e-2), float(jnp.max(jnp.abs(out - ref)))
    print("KERNEL_OK")
</pallas_src>

<mosaic_0001>
module attributes {stable_mosaic.version = 11 : i64} {
  func.func @_conv_fused_kernel(%arg0: i32, %arg1: memref<1x256x384xbf16, #tpu.memory_space<vmem>>, %arg2: memref<384x128xbf16, #tpu.memory_space<vmem>>, %arg3: memref<1x128xf32, #tpu.memory_space<vmem>>, %arg4: memref<1x256x128xf32, #tpu.memory_space<vmem>>) attributes {dimension_semantics = [#tpu.dimension_semantics<parallel>], iteration_bounds = array<i64: 2>, scalar_prefetch = 0 : i64, scratch_operands = 0 : i64, tpu.core_type = #tpu.core_type<tc>, window_params = [{transform_indices = @transform_0, window_bounds = array<i64: 1, 256, 384>}, {pipeline_mode = #tpu.pipeline_mode<synchronous>, transform_indices = @transform_1, window_bounds = array<i64: 384, 128>}, {pipeline_mode = #tpu.pipeline_mode<synchronous>, transform_indices = @transform_2, window_bounds = array<i64: 1, 128>}, {transform_indices = @transform_3, window_bounds = array<i64: 1, 256, 128>}]} {
    %c0 = arith.constant 0 : index
    %c0_0 = arith.constant 0 : index
    %c0_1 = arith.constant 0 : index
    %0 = vector.load %arg1[%c0, %c0_0, %c0_1] : memref<1x256x384xbf16, #tpu.memory_space<vmem>>, vector<1x256x384xbf16>
    %1 = vector.shape_cast %0 : vector<1x256x384xbf16> to vector<256x384xbf16>
    %c0_2 = arith.constant 0 : index
    %c0_3 = arith.constant 0 : index
    %2 = vector.load %arg2[%c0_2, %c0_3] : memref<384x128xbf16, #tpu.memory_space<vmem>>, vector<384x128xbf16>
    %cst = arith.constant dense<0.000000e+00> : vector<256x128xf32>
    %3 = tpu.matmul %1, %2, %cst {dimension_numbers = #tpu.dot_dimension_numbers<[1], [0], [0], [1], [0, 0, 1, 1], [], []>} : vector<256x384xbf16>, vector<384x128xbf16>, vector<256x128xf32> -> vector<256x128xf32>
    %c0_4 = arith.constant 0 : index
    %c0_5 = arith.constant 0 : index
    %4 = vector.load %arg3[%c0_4, %c0_5] : memref<1x128xf32, #tpu.memory_space<vmem>>, vector<1x128xf32>
    %5 = vector.broadcast %4 : vector<1x128xf32> to vector<256x128xf32>
    %6 = arith.addf %3, %5 : vector<256x128xf32>
    %cst_6 = arith.constant dense<0.000000e+00> : vector<128xf32>
    %7 = vector.multi_reduction <add>, %6, %cst_6 [0] : vector<256x128xf32> to vector<128xf32>
    %8 = vector.shape_cast %7 : vector<128xf32> to vector<1x128xf32>
    %cst_7 = arith.constant 2.560000e+02 : f32
    %9 = vector.broadcast %cst_7 : f32 to vector<1x128xf32>
    %10 = arith.divf %8, %9 : vector<1x128xf32>
    %11 = vector.broadcast %10 : vector<1x128xf32> to vector<256x128xf32>
    %12 = arith.subf %6, %11 : vector<256x128xf32>
    %13 = arith.mulf %12, %12 : vector<256x128xf32>
    %cst_8 = arith.constant dense<0.000000e+00> : vector<128xf32>
    %14 = vector.multi_reduction <add>, %13, %cst_8 [0] : vector<256x128xf32> to vector<128xf32>
    %15 = vector.shape_cast %14 : vector<128xf32> to vector<1x128xf32>
    %cst_9 = arith.constant 2.560000e+02 : f32
    %16 = vector.broadcast %cst_9 : f32 to vector<1x128xf32>
    %17 = arith.divf %15, %16 : vector<1x128xf32>
    %18 = vector.broadcast %10 : vector<1x128xf32> to vector<256x128xf32>
    %19 = arith.subf %6, %18 : vector<256x128xf32>
    %cst_10 = arith.constant 9.99999974E-6 : f32
    %20 = vector.broadcast %cst_10 : f32 to vector<1x128xf32>
    %21 = arith.addf %17, %20 : vector<1x128xf32>
    %22 = math.rsqrt %21 : vector<1x128xf32>
    %23 = vector.broadcast %22 : vector<1x128xf32> to vector<256x128xf32>
    %24 = arith.mulf %19, %23 : vector<256x128xf32>
    %cst_11 = arith.constant 0.000000e+00 : f32
    %25 = vector.broadcast %cst_11 : f32 to vector<256x128xf32>
    %26 = arith.cmpf ogt, %24, %25 : vector<256x128xf32>
    %cst_12 = arith.constant 2.000000e-01 : f32
    %27 = vector.broadcast %cst_12 : f32 to vector<256x128xf32>
    %28 = arith.mulf %27, %24 : vector<256x128xf32>
    %29 = arith.select %26, %24, %28 : vector<256x128xi1>, vector<256x128xf32>
    %c0_13 = arith.constant 0 : index
    %c0_14 = arith.constant 0 : index
    %c0_15 = arith.constant 0 : index
    %30 = vector.load %arg4[%c0_13, %c0_14, %c0_15] : memref<1x256x128xf32, #tpu.memory_space<vmem>>, vector<1x256x128xf32>
    %31 = vector.shape_cast %30 : vector<1x256x128xf32> to vector<256x128xf32>
    %32 = vector.shape_cast %29 : vector<256x128xf32> to vector<1x256x128xf32>
    tpu.vector_store %arg4[%c0_13, %c0_14, %c0_15], %32 {strides = array<i32>} : memref<1x256x128xf32, #tpu.memory_space<vmem>>, vector<1x256x128xf32>,
    return
  }
  func.func @transform_0(%arg0: i32) -> (i32, i32, i32) {
    %c0_i32 = arith.constant 0 : i32
    %c0_i32_0 = arith.constant 0 : i32
    %c0_i32_1 = arith.constant 0 : i32
    return %arg0, %c0_i32, %c0_i32_0 : i32, i32, i32
  }
  func.func @transform_1(%arg0: i32) -> (i32, i32) {
    %c0_i32 = arith.constant 0 : i32
    %c0_i32_0 = arith.constant 0 : i32
    %c0_i32_1 = arith.constant 0 : i32
    return %c0_i32, %c0_i32_0 : i32, i32
  }
  func.func @transform_2(%arg0: i32) -> (i32, i32) {
    %c0_i32 = arith.constant 0 : i32
    %c0_i32_0 = arith.constant 0 : i32
    %c0_i32_1 = arith.constant 0 : i32
    return %c0_i32, %c0_i32_0 : i32, i32
  }
  func.func @transform_3(%arg0: i32) -> (i32, i32, i32) {
    %c0_i32 = arith.constant 0 : i32
    %c0_i32_0 = arith.constant 0 : i32
    %c0_i32_1 = arith.constant 0 : i32
    return %arg0, %c0_i32, %c0_i32_0 : i32, i32, i32
  }
}

module attributes {stable_mosaic.version = 11 : i64} {
  func.func @_conv_fused_kernel(%arg0: i32, %arg1: memref<1x256x384xbf16, #tpu.memory_space<vmem>>, %arg2: memref<384x128xbf16, #tpu.memory_space<vmem>>, %arg3: memref<1x128xf32, #tpu.memory_space<vmem>>, %arg4: memref<1x256x128xf32, #tpu.memory_space<vmem>>) attributes {dimension_semantics = [#tpu.dimension_semantics<parallel>], iteration_bounds = array<i64: 2>, scalar_prefetch = 0 : i64, scratch_operands = 0 : i64, tpu.core_type = #tpu.core_type<tc>, window_params = [{transform_indices = @transform_0, window_bounds = array<i64: 1, 256, 384>}, {pipeline_mode = #tpu.pipeline_mode<synchronous>, transform_indices = @transform_1, window_bounds = array<i64: 384, 128>}, {pipeline_mode = #tpu.pipeline_mode<synchronous>, transform_indices = @transform_2, window_bounds = array<i64: 1, 128>}, {transform_indices = @transform_3, window_bounds = array<i64: 1, 256, 128>}]} {
    %c0 = arith.constant 0 : index
    %c0_0 = arith.constant 0 : index
    %c0_1 = arith.constant 0 : index
    %0 = vector.load %arg1[%c0, %c0_0, %c0_1] : memref<1x256x384xbf16, #tpu.memory_space<vmem>>, vector<1x256x384xbf16>
    %1 = vector.shape_cast %0 : vector<1x256x384xbf16> to vector<256x384xbf16>
    %c0_2 = arith.constant 0 : index
    %c0_3 = arith.constant 0 : index
    %2 = vector.load %arg2[%c0_2, %c0_3] : memref<384x128xbf16, #tpu.memory_space<vmem>>, vector<384x128xbf16>
    %cst = arith.constant dense<0.000000e+00> : vector<256x128xf32>
    %3 = tpu.matmul %1, %2, %cst {dimension_numbers = #tpu.dot_dimension_numbers<[1], [0], [0], [1], [0, 0, 1, 1], [], []>} : vector<256x384xbf16>, vector<384x128xbf16>, vector<256x128xf32> -> vector<256x128xf32>
    %c0_4 = arith.constant 0 : index
    %c0_5 = arith.constant 0 : index
    %4 = vector.load %arg3[%c0_4, %c0_5] : memref<1x128xf32, #tpu.memory_space<vmem>>, vector<1x128xf32>
    %5 = vector.broadcast %4 : vector<1x128xf32> to vector<256x128xf32>
    %6 = arith.addf %3, %5 : vector<256x128xf32>
    %c0_6 = arith.constant 0 : index
    %c0_7 = arith.constant 0 : index
    %c0_8 = arith.constant 0 : index
    %7 = vector.load %arg4[%c0_6, %c0_7, %c0_8] : memref<1x256x128xf32, #tpu.memory_space<vmem>>, vector<1x256x128xf32>
    %8 = vector.shape_cast %7 : vector<1x256x128xf32> to vector<256x128xf32>
    %9 = vector.shape_cast %6 : vector<256x128xf32> to vector<1x256x128xf32>
    tpu.vector_store %arg4[%c0_6, %c0_7, %c0_8], %9 {strides = array<i32>} : memref<1x256x128xf32, #tpu.memory_space<vmem>>, vector<1x256x128xf32>,
    return
  }
  func.func @transform_0(%arg0: i32) -> (i32, i32, i32) {
    %c0_i32 = arith.constant 0 : i32
    %c0_i32_0 = arith.constant 0 : i32
    %c0_i32_1 = arith.constant 0 : i32
    return %arg0, %c0_i32, %c0_i32_0 : i32, i32, i32
  }
  func.func @transform_1(%arg0: i32) -> (i32, i32) {
    %c0_i32 = arith.constant 0 : i32
    %c0_i32_0 = arith.constant 0 : i32
    %c0_i32_1 = arith.constant 0 : i32
    return %c0_i32, %c0_i32_0 : i32, i32
  }
  func.func @transform_2(%arg0: i32) -> (i32, i32) {
    %c0_i32 = arith.constant 0 : i32
    %c0_i32_0 = arith.constant 0 : i32
    %c0_i32_1 = arith.constant 0 : i32
    return %c0_i32, %c0_i32_0 : i32, i32
  }
  func.func @transform_3(%arg0: i32) -> (i32, i32, i32) {
    %c0_i32 = arith.constant 0 : i32
    %c0_i32_0 = arith.constant 0 : i32
    %c0_i32_1 = arith.constant 0 : i32
    return %arg0, %c0_i32, %c0_i32_0 : i32, i32, i32
  }
}

</mosaic_0001>

<llo_original>
// kernel: masknet_forward.3
$region0: #{masknet_forward.3}
  #allocation0 [shape = 'u32[]', space=smem, size = 0x4, offset = 0x4, fixed_abs, tag = 'smem constant byte address 0x4 - core index']
  #allocation1 [shape = 'u32[144,128]{1,0:T(1,128)}', space=vmem, size = 0x12000, scoped, tag = 'internal scratch']
  %s0 = inlined_call_operand.vmem [shape: bf16[2,256,384], index: 0, kind: input, shape index: {}]
  %s1 = inlined_call_operand.vmem [shape: bf16[384,128], index: 1, kind: input, shape index: {}]
  %s2 = inlined_call_operand.vmem [shape: f32[1,128], index: 2, kind: input, shape index: {}]
  %s3 = inlined_call_operand.vmem [shape: f32[2,256,128], index: 3, kind: output, shape index: {}]
  %s4 = sld [smem:[#allocation0]]
  $region45: #{masknet_forward.3} parent=0
    _
  %s6 = ssub.s32 1, %s4
  %s7 = scalar_select 0, %s6, %s4
  loop: start=0, step=1, limit=4
  $region2: #{masknet_forward.3} parent=0 // loop_pre_header
    _
  $region3: #{masknet_forward.3} parent=0 // loop_header
    %s9 = sphi 0, %s13
    %p10 = scmp.ge.s32.totalorder %s9, 4
    %s19 = sphi 0, %s21
    %s22 = sphi 0, %s19
    %s23 = sphi 0, %s22
    %s39 = sphi 0, %s23
    %s43 = sphi 0, %s43
    %s45 = sphi 0, %s43
    %s46 = sphi 0, %s45
    %s60 = sphi 0, %s46
    %s64 = sphi 0, %s64
    %s66 = sphi 0, %s64
    %s67 = sphi 0, %s66
    %s81 = sphi 0, %s67
    %s87 = sphi 0, %s89
    %s90 = sphi 0, %s87
    %s91 = sphi 0, %s90
    %s107 = sphi 0, %s91
  $region4: #{masknet_forward.3} parent=0 // loop_header_branch
    %12 = sbr.rel (%p10) target = $region8
  $region5: #{masknet_forward.3} parent=0 // loop_body
    %s14 = ssub.s32 %s9, 1
    %s15 = ssub.s32 %s9, 2
    %s16 = sadd.s32 %s9, 1
    %s17 = ssub.s32 %s9, %s16
    %p18 = scmp.eq.s32.totalorder %s17, 0
    %s20 = sadd.s32 %s19, 1
    %s21 = scalar_select %p18, %s19, %s20
    %p24 = pneg %p18
    %p25 = scmp.eq.s32.totalorder %s9, 1
    %p26 = por %p24, %p25
    %p27 = scmp.ne.s32.totalorder %s19, %s22
    %p28 = scmp.eq.s32.totalorder %s9, 0
    %p29 = por %p27, %p28
    %p30 = scmp.ne.s32.totalorder %s19, %s22
    %p31 = scmp.eq.s32.totalorder %s14, 1
    %p32 = por %p30, %p31
    %p33 = scmp.ne.s32.totalorder %s22, %s23
    %p34 = scmp.eq.s32.totalorder %s14, 0
    %p35 = por %p33, %p34
    %p36 = scmp.ne.s32.totalorder %s22, %s23
    %p37 = scmp.eq.s32.totalorder %s15, 1
    %p38 = por %p36, %p37
    %p40 = scmp.ne.s32.totalorder %s23, %s39
    %p41 = scmp.eq.s32.totalorder %s15, 0
    %p42 = por %p40, %p41
    %s44 = sadd.s32 %s43, 1
    %p47 = scmp.eq.s32.totalorder %s9, 1
    %p48 = scmp.ne.s32.totalorder %s43, %s45
    %p49 = scmp.eq.s32.totalorder %s9, 0
    %p50 = por %p48, %p49
    %p51 = scmp.ne.s32.totalorder %s43, %s45
    %p52 = scmp.eq.s32.totalorder %s14, 1
    %p53 = por %p51, %p52
    %p54 = scmp.ne.s32.totalorder %s45, %s46
    %p55 = scmp.eq.s32.totalorder %s14, 0
    %p56 = por %p54, %p55
    %p57 = scmp.ne.s32.totalorder %s45, %s46
    %p58 = scmp.eq.s32.totalorder %s15, 1
    %p59 = por %p57, %p58
    %p61 = scmp.ne.s32.totalorder %s46, %s60
    %p62 = scmp.eq.s32.totalorder %s15, 0
    %p63 = por %p61, %p62
    %s65 = sadd.s32 %s64, 1
    %p68 = scmp.eq.s32.totalorder %s9, 1
    %p69 = scmp.ne.s32.totalorder %s64, %s66
    %p70 = scmp.eq.s32.totalorder %s9, 0
    %p71 = por %p69, %p70
    %p72 = scmp.ne.s32.totalorder %s64, %s66
    %p73 = scmp.eq.s32.totalorder %s14, 1
    %p74 = por %p72, %p73
    %p75 = scmp.ne.s32.totalorder %s66, %s67
    %p76 = scmp.eq.s32.totalorder %s14, 0
    %p77 = por %p75, %p76
    %p78 = scmp.ne.s32.totalorder %s66, %s67
    %p79 = scmp.eq.s32.totalorder %s15, 1
    %p80 = por %p78, %p79
    %p82 = scmp.ne.s32.totalorder %s67, %s81
    %p83 = scmp.eq.s32.totalorder %s15, 0
    %p84 = por %p82, %p83
    %s85 = ssub.s32 %s9, %s16
    %p86 = scmp.eq.s32.totalorder %s85, 0
    %s88 = sadd.s32 %s87, 1
    %s89 = scalar_select %p86, %s87, %s88
    %p92 = pneg %p86
    %p93 = scmp.eq.s32.totalorder %s9, 1
    %p94 = por %p92, %p93
    %p95 = scmp.ne.s32.totalorder %s87, %s90
    %p96 = scmp.eq.s32.totalorder %s9, 0
    %p97 = por %p95, %p96
    %p98 = scmp.ne.s32.totalorder %s87, %s90
    %p99 = scmp.eq.s32.totalorder %s14, 1
    %p100 = por %p98, %p99
    %p101 = scmp.ne.s32.totalorder %s90, %s91
    %p102 = scmp.eq.s32.totalorder %s14, 0
    %p103 = por %p101, %p102
    %p104 = scmp.ne.s32.totalorder %s90, %s91
    %p105 = scmp.eq.s32.totalorder %s15, 1
    %p106 = por %p104, %p105
    %p108 = scmp.ne.s32.totalorder %s91, %s107
    %p109 = scmp.eq.s32.totalorder %s15, 0
    %p110 = por %p108, %p109
    %p111 = scmp.le.s32.totalorder 1, %s9
    %p112 = scmp.lt.s32.totalorder %s9, 3
    %p113 = pnand %p111, %p112
    %p114 = pneg %p113
    // Predicated region
    $region9: #{masknet_forward.3} parent=5 // pred_check
      _
    $region10: #{masknet_forward.3} parent=5 // pred_check_branch
      %116 = sbr.rel (%p113) target = $region12
    $region11: #{masknet_forward.3} parent=5 // pred_region
      %s117 = ssub.s32 %s9, 1
      // Predicated region
      $region13: #{masknet_forward.3} parent=11 // pred_check
        %p118 = pneg %p56
      $region14: #{masknet_forward.3} parent=11 // pred_check_branch
        %120 = sbr.rel (%p118) target = $region16
      $region15: #{masknet_forward.3} parent=11 // pred_region
        _
      $region16: #{masknet_forward.3} parent=11 // pred_fallthru
        _
      // Predicated region
      $region17: #{masknet_forward.3} parent=11 // pred_check
        %p121 = pneg %p77
      $region18: #{masknet_forward.3} parent=11 // pred_check_branch
        %123 = sbr.rel (%p121) target = $region20
      $region19: #{masknet_forward.3} parent=11 // pred_region
        _
      $region20: #{masknet_forward.3} parent=11 // pred_fallthru
        _
    $region12: #{masknet_forward.3} parent=5 // pred_fallthru
      _
    %p124 = scmp.lt.s32.totalorder %s9, 2
    // Predicated region
    $region21: #{masknet_forward.3} parent=5 // pred_check
      %p125 = pneg %p124
    $region22: #{masknet_forward.3} parent=5 // pred_check_branch
      %127 = sbr.rel (%p125) target = $region24
    $region23: #{masknet_forward.3} parent=5 // pred_region
      // Predicated region
      $region25: #{masknet_forward.3} parent=23 // pred_check
        %p128 = pneg %p29
      $region26: #{masknet_forward.3} parent=23 // pred_check_branch
        %130 = sbr.rel (%p128) target = $region28
      $region27: #{masknet_forward.3} parent=23 // pred_region
        %p131 = scmp.lt.s32.totalorder %s9, 1
        %s132 = scalar_select %p131, %s9, 1
        %s133 = smul.addr %s132, 96
        %s134 = smul.addr %s133, 4
        %s135 = scalar_lea.vmem %s0, %s134
      $region28: #{masknet_forward.3} parent=23 // pred_fallthru
        _
    $region24: #{masknet_forward.3} parent=5 // pred_fallthru
      _
    %p136 = scmp.le.s32.totalorder 1, %s9
    %p137 = scmp.lt.s32.totalorder %s9, 3
    %p138 = pnand %p136, %p137
    %p139 = pneg %p138
    // Predicated region
    $region29: #{masknet_forward.3} parent=5 // pred_check
      _
    $region30: #{masknet_forward.3} parent=5 // pred_check_branch
      %141 = sbr.rel (%p138) target = $region32
    $region31: #{masknet_forward.3} parent=5 // pred_region
      %s142 = ssub.s32 %s9, 1
      %p143 = scmp.lt.s32.totalorder %s14, 1
      %s144 = scalar_select %p143, %s14, 1
      %s145 = smul.addr %s144, 96
      %s146 = smul.addr %s145, 4
      %s147 = scalar_lea.vmem %s0, %s146
      %p148 = pneg %p35
      %p149 = pneg %p32
      %p150 = pneg %p56
      %p151 = pneg %p53
      %p152 = pneg %p77
      %p153 = pneg %p74
      %p154 = pneg %p103
      %p155 = pneg %p100
      %p156 = scmp.lt.s32.totalorder %s14, 1
      %s157 = scalar_select %p156, %s14, 1
      %s158 = smul.addr %s157, 32
      %s159 = smul.addr %s158, 8
      %s160 = scalar_lea.vmem %s3, %s159
      %p161 = scmp.lt.s32.totalorder %s14, 1
      %s162 = scalar_select %p161, %s14, 1
      %s163 = smul.addr %s162, 96
      %s164 = smul.addr %s163, 4
      %s165 = scalar_lea.vmem %s0, %s164
      %p166 = scmp.lt.s32.totalorder %s14, 1
      %s167 = scalar_select %p166, %s14, 1
      %s168 = smul.addr %s167, 32
      %s169 = smul.addr %s168, 8
      %s170 = scalar_lea.vmem %s3, %s169
      %v172 = vld [vmem:[%s165] sm:$0xff]
      %v173 = vld [vmem:[%s165 + $0x8] sm:$0xf]
      %v174 = vld [vmem:[%s165 + $0xc] sm:$0xff]
      %v175 = vld [vmem:[%s165 + $0x14] sm:$0xf]
      %v176 = vld [vmem:[%s165 + $0x18] sm:$0xff]
      %v177 = vld [vmem:[%s165 + $0x20] sm:$0xf]
      %v178 = vld [vmem:[%s165 + $0x24] sm:$0xff]
      %v179 = vld [vmem:[%s165 + $0x2c] sm:$0xf]
      %v180 = vld [vmem:[%s165 + $0x30] sm:$0xff]
      %v181 = vld [vmem:[%s165 + $0x38] sm:$0xf]
      %v182 = vld [vmem:[%s165 + $0x3c] sm:$0xff]
      %v183 = vld [vmem:[%s165 + $0x44] sm:$0xf]
      %v184 = vld [vmem:[%s165 + $0x48] sm:$0xff]
      %v185 = vld [vmem:[%s165 + $0x50] sm:$0xf]
      %v186 = vld [vmem:[%s165 + $0x54] sm:$0xff]
      %v187 = vld [vmem:[%s165 + $0x5c] sm:$0xf]
      %v188 = vld [vmem:[%s165 + $0x60] sm:$0xff]
      %v189 = vld [vmem:[%s165 + $0x68] sm:$0xf]
      %v190 = vld [vmem:[%s165 + $0x6c] sm:$0xff]
      %v191 = vld [vmem:[%s165 + $0x74] sm:$0xf]
      %v192 = vld [vmem:[%s165 + $0x78] sm:$0xff]
      %v193 = vld [vmem:[%s165 + $0x80] sm:$0xf]
      %v194 = vld [vmem:[%s165 + $0x84] sm:$0xff]
      %v195 = vld [vmem:[%s165 + $0x8c] sm:$0xf]
      %v196 = vld [vmem:[%s165 + $0x90] sm:$0xff]
      %v197 = vld [vmem:[%s165 + $0x98] sm:$0xf]
      %v198 = vld [vmem:[%s165 + $0x9c] sm:$0xff]
      %v199 = vld [vmem:[%s165 + $0xa4] sm:$0xf]
      %v200 = vld [vmem:[%s165 + $0xa8] sm:$0xff]
      %v201 = vld [vmem:[%s165 + $0xb0] sm:$0xf]
      %v202 = vld [vmem:[%s165 + $0xb4] sm:$0xff]
      %v203 = vld [vmem:[%s165 + $0xbc] sm:$0xf]
      %v204 = vld [vmem:[%s165 + $0xc0] sm:$0xff]
      %v205 = vld [vmem:[%s165 + $0xc8] sm:$0xf]
      %v206 = vld [vmem:[%s165 + $0xcc] sm:$0xff]
      %v207 = vld [vmem:[%s165 + $0xd4] sm:$0xf]
      %v208 = vld [vmem:[%s165 + $0xd8] sm:$0xff]
      %v209 = vld [vmem:[%s165 + $0xe0] sm:$0xf]
      %v210 = vld [vmem:[%s165 + $0xe4] sm:$0xff]
      %v211 = vld [vmem:[%s165 + $0xec] sm:$0xf]
      %v212 = vld [vmem:[%s165 + $0xf0] sm:$0xff]
      %v213 = vld [vmem:[%s165 + $0xf8] sm:$0xf]
      %v214 = vld [vmem:[%s165 + $0xfc] sm:$0xff]
      %v215 = vld [vmem:[%s165 + $0x104] sm:$0xf]
      %v216 = vld [vmem:[%s165 + $0x108] sm:$0xff]
      %v217 = vld [vmem:[%s165 + $0x110] sm:$0xf]
      %v218 = vld [vmem:[%s165 + $0x114] sm:$0xff]
      %v219 = vld [vmem:[%s165 + $0x11c] sm:$0xf]
      %v220 = vld [vmem:[%s165 + $0x120] sm:$0xff]
      %v221 = vld [vmem:[%s165 + $0x128] sm:$0xf]
      %v222 = vld [vmem:[%s165 + $0x12c] sm:$0xff]
      %v223 = vld [vmem:[%s165 + $0x134] sm:$0xf]
      %v224 = vld [vmem:[%s165 + $0x138] sm:$0xff]
      %v225 = vld [vmem:[%s165 + $0x140] sm:$0xf]
      %v226 = vld [vmem:[%s165 + $0x144] sm:$0xff]
      %v227 = vld [vmem:[%s165 + $0x14c] sm:$0xf]
      %v228 = vld [vmem:[%s165 + $0x150] sm:$0xff]
      %v229 = vld [vmem:[%s165 + $0x158] sm:$0xf]
      %v230 = vld [vmem:[%s165 + $0x15c] sm:$0xff]
      %v231 = vld [vmem:[%s165 + $0x164] sm:$0xf]
      %v232 = vld [vmem:[%s165 + $0x168] sm:$0xff]
      %v233 = vld [vmem:[%s165 + $0x170] sm:$0xf]
      %v234 = vld [vmem:[%s165 + $0x174] sm:$0xff]
      %v235 = vld [vmem:[%s165 + $0x17c] sm:$0xf]
      %v236 = vld [vmem:[%s1] sm:$0xf]
      %v237 = vld [vmem:[%s1 + $0x4] sm:$0xf]
      %v238 = vld [vmem:[%s1 + $0x8] sm:$0xf]
      %v239 = vld [vmem:[%s1 + $0xc] sm:$0xf]
      %v240 = vld [vmem:[%s1 + $0x10] sm:$0xf]
      %v241 = vld [vmem:[%s1 + $0x14] sm:$0xf]
      %v242 = vld [vmem:[%s1 + $0x18] sm:$0xf]
      %v243 = vld [vmem:[%s1 + $0x1c] sm:$0xf]
      %v244 = vld [vmem:[%s1 + $0x20] sm:$0xf]
      %v245 = vld [vmem:[%s1 + $0x24] sm:$0xf]
      %v246 = vld [vmem:[%s1 + $0x28] sm:$0xf]
      %v247 = vld [vmem:[%s1 + $0x2c] sm:$0xf]
      %v248 = vld [vmem:[%s1 + $0x30] sm:$0xf]
      %v249 = vld [vmem:[%s1 + $0x34] sm:$0xf]
      %v250 = vld [vmem:[%s1 + $0x38] sm:$0xf]
      %v251 = vld [vmem:[%s1 + $0x3c] sm:$0xf]
      %v252 = vld [vmem:[%s1 + $0x40] sm:$0xf]
      %v253 = vld [vmem:[%s1 + $0x44] sm:$0xf]
      %v254 = vld [vmem:[%s1 + $0x48] sm:$0xf]
      %v255 = vld [vmem:[%s1 + $0x4c] sm:$0xf]
      %v256 = vld [vmem:[%s1 + $0x50] sm:$0xf]
      %v257 = vld [vmem:[%s1 + $0x54] sm:$0xf]
      %v258 = vld [vmem:[%s1 + $0x58] sm:$0xf]
      %v259 = vld [vmem:[%s1 + $0x5c] sm:$0xf]
      %v260 = vld [vmem:[%s1 + $0x60] sm:$0xf]
      %v261 = vld [vmem:[%s1 + $0x64] sm:$0xf]
      %v262 = vld [vmem:[%s1 + $0x68] sm:$0xf]
      %v263 = vld [vmem:[%s1 + $0x6c] sm:$0xf]
      %v264 = vld [vmem:[%s1 + $0x70] sm:$0xf]
      %v265 = vld [vmem:[%s1 + $0x74] sm:$0xf]
      %v266 = vld [vmem:[%s1 + $0x78] sm:$0xf]
      %v267 = vld [vmem:[%s1 + $0x7c] sm:$0xf]
      %v268 = vld [vmem:[%s1 + $0x80] sm:$0xf]
      %v269 = vld [vmem:[%s1 + $0x84] sm:$0xf]
      %v270 = vld [vmem:[%s1 + $0x88] sm:$0xf]
      %v271 = vld [vmem:[%s1 + $0x8c] sm:$0xf]
      %v272 = vld [vmem:[%s1 + $0x90] sm:$0xf]
      %v273 = vld [vmem:[%s1 + $0x94] sm:$0xf]
      %v274 = vld [vmem:[%s1 + $0x98] sm:$0xf]
      %v275 = vld [vmem:[%s1 + $0x9c] sm:$0xf]
      %v276 = vld [vmem:[%s1 + $0xa0] sm:$0xf]
      %v277 = vld [vmem:[%s1 + $0xa4] sm:$0xf]
      %v278 = vld [vmem:[%s1 + $0xa8] sm:$0xf]
      %v279 = vld [vmem:[%s1 + $0xac] sm:$0xf]
      %v280 = vld [vmem:[%s1 + $0xb0] sm:$0xf]
      %v281 = vld [vmem:[%s1 + $0xb4] sm:$0xf]
      %v282 = vld [vmem:[%s1 + $0xb8] sm:$0xf]
      %v283 = vld [vmem:[%s1 + $0xbc] sm:$0xf]
      %v284 = vld [vmem:[%s2] sm:$0x1]
      %v286 = vlaneseq
      %v287 = vshrl.u32 %v286, 7
      %v288 = vsub.s32 0, %v287
      %v289 = vrot.slane %v284, %v288
      %v355 = vunpack.c.l.b16 %v172
      %v356 = vunpack.c.h.b16 %v172
      %v357 = vunpack.c.l.b16 %v173
      %v358 = vunpack.c.l.b16 %v174
      %v359 = vunpack.c.h.b16 %v174
      %v360 = vunpack.c.l.b16 %v175
      %v361 = vunpack.c.l.b16 %v176
      %v362 = vunpack.c.h.b16 %v176
      %v363 = vunpack.c.l.b16 %v177
      %v364 = vunpack.c.l.b16 %v178
      %v365 = vunpack.c.h.b16 %v178
      %v366 = vunpack.c.l.b16 %v179
      %v367 = vunpack.c.l.b16 %v180
      %v368 = vunpack.c.h.b16 %v180
      %v369 = vunpack.c.l.b16 %v181
      %v370 = vunpack.c.l.b16 %v182
      %v371 = vunpack.c.h.b16 %v182
      %v372 = vunpack.c.l.b16 %v183
      %v373 = vunpack.c.l.b16 %v184
      %v374 = vunpack.c.h.b16 %v184
      %v375 = vunpack.c.l.b16 %v185
      %v376 = vunpack.c.l.b16 %v186
      %v377 = vunpack.c.h.b16 %v186
      %v378 = vunpack.c.l.b16 %v187
      %v379 = vunpack.c.l.b16 %v188
      %v380 = vunpack.c.h.b16 %v188
      %v381 = vunpack.c.l.b16 %v189
      %v382 = vunpack.c.l.b16 %v190
      %v383 = vunpack.c.h.b16 %v190
      %v384 = vunpack.c.l.b16 %v191
      %v385 = vunpack.c.l.b16 %v192
      %v386 = vunpack.c.h.b16 %v192
      %v387 = vunpack.c.l.b16 %v193
      %v388 = vunpack.c.l.b16 %v194
      %v389 = vunpack.c.h.b16 %v194
      %v390 = vunpack.c.l.b16 %v195
      %v391 = vunpack.c.l.b16 %v196
      %v392 = vunpack.c.h.b16 %v196
      %v393 = vunpack.c.l.b16 %v197
      %v394 = vunpack.c.l.b16 %v198
      %v395 = vunpack.c.h.b16 %v198
      %v396 = vunpack.c.l.b16 %v199
      %v397 = vunpack.c.l.b16 %v200
      %v398 = vunpack.c.h.b16 %v200
      %v399 = vunpack.c.l.b16 %v201
      %v400 = vunpack.c.l.b16 %v202
      %v401 = vunpack.c.h.b16 %v202
      %v402 = vunpack.c.l.b16 %v203
      %v403 = vunpack.c.l.b16 %v204
      %v404 = vunpack.c.h.b16 %v204
      %v405 = vunpack.c.l.b16 %v205
      %v406 = vunpack.c.l.b16 %v206
      %v407 = vunpack.c.h.b16 %v206
      %v408 = vunpack.c.l.b16 %v207
      %v409 = vunpack.c.l.b16 %v208
      %v410 = vunpack.c.h.b16 %v208
      %v411 = vunpack.c.l.b16 %v209
      %v412 = vunpack.c.l.b16 %v210
      %v413 = vunpack.c.h.b16 %v210
      %v414 = vunpack.c.l.b16 %v211
      %v415 = vunpack.c.l.b16 %v212
      %v416 = vunpack.c.h.b16 %v212
      %v417 = vunpack.c.l.b16 %v213
      %v418 = vunpack.c.l.b16 %v214
      %v419 = vunpack.c.h.b16 %v214
      %v420 = vunpack.c.l.b16 %v215
      %v421 = vunpack.c.l.b16 %v216
      %v422 = vunpack.c.h.b16 %v216
      %v423 = vunpack.c.l.b16 %v217
      %v424 = vunpack.c.l.b16 %v218
      %v425 = vunpack.c.h.b16 %v218
      %v426 = vunpack.c.l.b16 %v219
      %v427 = vunpack.c.l.b16 %v220
      %v428 = vunpack.c.h.b16 %v220
      %v429 = vunpack.c.l.b16 %v221
      %v430 = vunpack.c.l.b16 %v222
      %v431 = vunpack.c.h.b16 %v222
      %v432 = vunpack.c.l.b16 %v223
      %v433 = vunpack.c.l.b16 %v224
      %v434 = vunpack.c.h.b16 %v224
      %v435 = vunpack.c.l.b16 %v225
      %v436 = vunpack.c.l.b16 %v226
      %v437 = vunpack.c.h.b16 %v226
      %v438 = vunpack.c.l.b16 %v227
      %v439 = vunpack.c.l.b16 %v228
      %v440 = vunpack.c.h.b16 %v228
      %v441 = vunpack.c.l.b16 %v229
      %v442 = vunpack.c.l.b16 %v230
      %v443 = vunpack.c.h.b16 %v230
      %v444 = vunpack.c.l.b16 %v231
      %v445 = vunpack.c.l.b16 %v232
      %v446 = vunpack.c.h.b16 %v232
      %v447 = vunpack.c.l.b16 %v233
      %v448 = vunpack.c.l.b16 %v234
      %v449 = vunpack.c.h.b16 %v234
      %v450 = vunpack.c.l.b16 %v235
      %v451 = vpack.c.b16 %v358, %v355
      %v452 = vpack.c.b16 %v359, %v356
      %v453 = vpack.c.b16 %v360, %v357
      %v454 = vpack.c.b16 %v364, %v361
      %v455 = vpack.c.b16 %v365, %v362
      %v456 = vpack.c.b16 %v366, %v363
      %v457 = vpack.c.b16 %v370, %v367
      %v458 = vpack.c.b16 %v371, %v368
      %v459 = vpack.c.b16 %v372, %v369
      %v460 = vpack.c.b16 %v376, %v373
      %v461 = vpack.c.b16 %v377, %v374
      %v462 = vpack.c.b16 %v378, %v375
      %v463 = vpack.c.b16 %v382, %v379
      %v464 = vpack.c.b16 %v383, %v380
      %v465 = vpack.c.b16 %v384, %v381
      %v466 = vpack.c.b16 %v388, %v385
      %v467 = vpack.c.b16 %v389, %v386
      %v468 = vpack.c.b16 %v390, %v387
      %v469 = vpack.c.b16 %v394, %v391
      %v470 = vpack.c.b16 %v395, %v392
      %v471 = vpack.c.b16 %v396, %v393
      %v472 = vpack.c.b16 %v400, %v397
      %v473 = vpack.c.b16 %v401, %v398
      %v474 = vpack.c.b16 %v402, %v399
      %v475 = vpack.c.b16 %v406, %v403
      %v476 = vpack.c.b16 %v407, %v404
      %v477 = vpack.c.b16 %v408, %v405
      %v478 = vpack.c.b16 %v412, %v409
      %v479 = vpack.c.b16 %v413, %v410
      %v480 = vpack.c.b16 %v414, %v411
      %v481 = vpack.c.b16 %v418, %v415
      %v482 = vpack.c.b16 %v419, %v416
      %v483 = vpack.c.b16 %v420, %v417
      %v484 = vpack.c.b16 %v424, %v421
      %v485 = vpack.c.b16 %v425, %v422
      %v486 = vpack.c.b16 %v426, %v423
      %v487 = vpack.c.b16 %v430, %v427
      %v488 = vpack.c.b16 %v431, %v428
      %v489 = vpack.c.b16 %v432, %v429
      %v490 = vpack.c.b16 %v436, %v433
      %v491 = vpack.c.b16 %v437, %v434
      %v492 = vpack.c.b16 %v438, %v435
      %v493 = vpack.c.b16 %v442, %v439
      %v494 = vpack.c.b16 %v443, %v440
      %v495 = vpack.c.b16 %v444, %v441
      %v496 = vpack.c.b16 %v448, %v445
      %v497 = vpack.c.b16 %v449, %v446
      %v498 = vpack.c.b16 %v450, %v447
      %v595 = vunpack.c.l.b16 %v236
      %v596 = vunpack.c.l.b16 %v237
      %v597 = vunpack.c.l.b16 %v238
      %v598 = vunpack.c.l.b16 %v239
      %v599 = vunpack.c.l.b16 %v240
      %v600 = vunpack.c.l.b16 %v241
      %v601 = vunpack.c.l.b16 %v242
      %v602 = vunpack.c.l.b16 %v243
      %v603 = vunpack.c.l.b16 %v244
      %v604 = vunpack.c.l.b16 %v245
      %v605 = vunpack.c.l.b16 %v246
      %v606 = vunpack.c.l.b16 %v247
      %v607 = vunpack.c.l.b16 %v248
      %v608 = vunpack.c.l.b16 %v249
      %v609 = vunpack.c.l.b16 %v250
      %v610 = vunpack.c.l.b16 %v251
      %v611 = vunpack.c.l.b16 %v252
      %v612 = vunpack.c.l.b16 %v253
      %v613 = vunpack.c.l.b16 %v254
      %v614 = vunpack.c.l.b16 %v255
      %v615 = vunpack.c.l.b16 %v256
      %v616 = vunpack.c.l.b16 %v257
      %v617 = vunpack.c.l.b16 %v258
      %v618 = vunpack.c.l.b16 %v259
      %v619 = vunpack.c.l.b16 %v260
      %v620 = vunpack.c.l.b16 %v261
      %v621 = vunpack.c.l.b16 %v262
      %v622 = vunpack.c.l.b16 %v263
      %v623 = vunpack.c.l.b16 %v264
      %v624 = vunpack.c.l.b16 %v265
      %v625 = vunpack.c.l.b16 %v266
      %v626 = vunpack.c.l.b16 %v267
      %v627 = vunpack.c.l.b16 %v268
      %v628 = vunpack.c.l.b16 %v269
      %v629 = vunpack.c.l.b16 %v270
      %v630 = vunpack.c.l.b16 %v271
      %v631 = vunpack.c.l.b16 %v272
      %v632 = vunpack.c.l.b16 %v273
      %v633 = vunpack.c.l.b16 %v274
      %v634 = vunpack.c.l.b16 %v275
      %v635 = vunpack.c.l.b16 %v276
      %v636 = vunpack.c.l.b16 %v277
      %v637 = vunpack.c.l.b16 %v278
      %v638 = vunpack.c.l.b16 %v279
      %v639 = vunpack.c.l.b16 %v280
      %v640 = vunpack.c.l.b16 %v281
      %v641 = vunpack.c.l.b16 %v282
      %v642 = vunpack.c.l.b16 %v283
      %v643 = vpack.c.b16 %v596, %v595
      %v644 = vpack.c.b16 %v598, %v597
      %v645 = vpack.c.b16 %v600, %v599
      %v646 = vpack.c.b16 %v602, %v601
      %v647 = vpack.c.b16 %v604, %v603
      %v648 = vpack.c.b16 %v606, %v605
      %v649 = vpack.c.b16 %v608, %v607
      %v650 = vpack.c.b16 %v610, %v609
      %v651 = vpack.c.b16 %v612, %v611
      %v652 = vpack.c.b16 %v614, %v613
      %v653 = vpack.c.b16 %v616, %v615
      %v654 = vpack.c.b16 %v618, %v617
      %v655 = vpack.c.b16 %v620, %v619
      %v656 = vpack.c.b16 %v622, %v621
      %v657 = vpack.c.b16 %v624, %v623
      %v658 = vpack.c.b16 %v626, %v625
      %v659 = vpack.c.b16 %v628, %v627
      %v660 = vpack.c.b16 %v630, %v629
      %v661 = vpack.c.b16 %v632, %v631
      %v662 = vpack.c.b16 %v634, %v633
      %v663 = vpack.c.b16 %v636, %v635
      %v664 = vpack.c.b16 %v638, %v637
      %v665 = vpack.c.b16 %v640, %v639
      %v666 = vpack.c.b16 %v642, %v641
      %691 = vmatprep.subr.bf16.mxu0 0
      %692 = vmatpush1.bf16.msra.mxu0 %v643
      %693 = vmatprep.subr.bf16.mxu0 0
      %694 = vmatpush1.bf16.msra.mxu0 %v644
      %695 = vmatprep.subr.bf16.mxu0 0
      %696 = vmatpush1.bf16.msra.mxu0 %v645
      %697 = vmatprep.subr.bf16.mxu0 0
      %698 = vmatpush1.bf16.msra.mxu0 %v646
      %699 = vmatprep.subr.bf16.mxu0 0
      %700 = vmatpush1.bf16.msra.mxu0 %v647
      %701 = vmatprep.subr.bf16.mxu0 0
      %702 = vmatpush1.bf16.msra.mxu0 %v648
      %703 = vmatprep.subr.bf16.mxu0 0
      %704 = vmatpush1.bf16.msra.mxu0 %v649
      %705 = vmatprep.subr.bf16.mxu0 0
      %706 = vmatpush1.bf16.msra.mxu0 %v650
      %707 = vmatprep.subr.bf16.mxu0 0
      %708 = vmatpush1.bf16.msra.mxu0 %v651
      %709 = vmatprep.subr.bf16.mxu0 0
      %710 = vmatpush1.bf16.msra.mxu0 %v652
      %711 = vmatprep.subr.bf16.mxu0 0
      %712 = vmatpush1.bf16.msra.mxu0 %v653
      %713 = vmatprep.subr.bf16.mxu0 0
      %714 = vmatpush1.bf16.msra.mxu0 %v654
      %715 = vmatprep.subr.bf16.mxu0 0
      %716 = vmatpush1.bf16.msra.mxu0 %v655
      %717 = vmatprep.subr.bf16.mxu0 0
      %718 = vmatpush1.bf16.msra.mxu0 %v656
      %719 = vmatprep.subr.bf16.mxu0 0
      %720 = vmatpush1.bf16.msra.mxu0 %v657
      %721 = vmatprep.subr.bf16.mxu0 0
      %722 = vmatpush1.bf16.msra.mxu0 %v658
      %723 = vmatprep.mubr.bf16.mxu0 %v452
      %724 = vmatmul.mubr.bf16.gmra.mrb[0].mxu0 %v451
      %v725 = vpop.f32.mrb[0].mxu0
      %v726 = vadd.f32 %v289, %v725
      %v727 = vpop.f32.mrb[0].mxu0
      %v728 = vpop.f32.mrb[0].mxu0
      %v729 = vadd.f32 %v289, %v728
      %v730 = vpop.f32.mrb[0].mxu0
      %731 = vmatprep.mubr.bf16.mxu0 %v455
      %732 = vmatmul.mubr.bf16.gmra.mrb[0].mxu0 %v454
      %v733 = vpop.f32.mrb[0].mxu0
      %v734 = vadd.f32 %v289, %v733
      %v735 = vpop.f32.mrb[0].mxu0
      %v736 = vpop.f32.mrb[0].mxu0
      %v737 = vadd.f32 %v289, %v736
      %v738 = vpop.f32.mrb[0].mxu0
      %739 = vmatprep.mubr.bf16.mxu0 %v458
      %740 = vmatmul.mubr.bf16.gmra.mrb[0].mxu0 %v457
      %v741 = vpop.f32.mrb[0].mxu0
      %v742 = vadd.f32 %v289, %v741
      %v743 = vpop.f32.mrb[0].mxu0
      %v744 = vpop.f32.mrb[0].mxu0
      %v745 = vadd.f32 %v289, %v744
      %v746 = vpop.f32.mrb[0].mxu0
      %747 = vmatprep.mubr.bf16.mxu0 %v461
      %748 = vmatmul.mubr.bf16.gmra.mrb[0].mxu0 %v460
      %v749 = vpop.f32.mrb[0].mxu0
      %v750 = vadd.f32 %v289, %v749
      %v751 = vpop.f32.mrb[0].mxu0
      %v752 = vpop.f32.mrb[0].mxu0
      %v753 = vadd.f32 %v289, %v752
      %v754 = vpop.f32.mrb[0].mxu0
      %755 = vmatprep.mubr.bf16.mxu0 %v464
      %756 = vmatmul.mubr.bf16.gmra.mrb[0].mxu0 %v463
      %v757 = vpop.f32.mrb[0].mxu0
      %v758 = vadd.f32 %v289, %v757
      %v759 = vpop.f32.mrb[0].mxu0
      %v760 = vpop.f32.mrb[0].mxu0
      %v761 = vadd.f32 %v289, %v760
      %v762 = vpop.f32.mrb[0].mxu0
      %763 = vmatprep.mubr.bf16.mxu0 %v467
      %764 = vmatmul.mubr.bf16.gmra.mrb[0].mxu0 %v466
      %v765 = vpop.f32.mrb[0].mxu0
      %v766 = vadd.f32 %v289, %v765
      %v767 = vpop.f32.mrb[0].mxu0
      %v768 = vpop.f32.mrb[0].mxu0
      %v769 = vadd.f32 %v289, %v768
      %v770 = vpop.f32.mrb[0].mxu0
      %771 = vmatprep.mubr.bf16.mxu0 %v470
      %772 = vmatmul.mubr.bf16.gmra.mrb[0].mxu0 %v469
      %v773 = vpop.f32.mrb[0].mxu0
      %v774 = vadd.f32 %v289, %v773
      %v775 = vpop.f32.mrb[0].mxu0
      %v776 = vpop.f32.mrb[0].mxu0
      %v777 = vadd.f32 %v289, %v776
      %v778 = vpop.f32.mrb[0].mxu0
      %779 = vmatprep.mubr.bf16.mxu0 %v473
      %780 = vmatmul.mubr.bf16.gmra.mrb[0].mxu0 %v472
      %v781 = vpop.f32.mrb[0].mxu0
      %v782 = vadd.f32 %v289, %v781
      %v783 = vpop.f32.mrb[0].mxu0
      %v784 = vpop.f32.mrb[0].mxu0
      %v785 = vadd.f32 %v289, %v784
      %v786 = vpop.f32.mrb[0].mxu0
      %787 = vmatprep.mubr.bf16.mxu0 %v476
      %788 = vmatmul.mubr.bf16.gmra.mrb[0].mxu0 %v475
      %v789 = vpop.f32.mrb[0].mxu0
      %v790 = vadd.f32 %v289, %v789
      %v791 = vpop.f32.mrb[0].mxu0
      %v792 = vpop.f32.mrb[0].mxu0
      %v793 = vadd.f32 %v289, %v792
      %v794 = vpop.f32.mrb[0].mxu0
      %795 = vmatprep.mubr.bf16.mxu0 %v479
      %796 = vmatmul.mubr.bf16.gmra.mrb[0].mxu0 %v478
      %v797 = vpop.f32.mrb[0].mxu0
      %v798 = vadd.f32 %v289, %v797
      %v799 = vpop.f32.mrb[0].mxu0
      %v800 = vpop.f32.mrb[0].mxu0
      %v801 = vadd.f32 %v289, %v800
      %v802 = vpop.f32.mrb[0].mxu0
      %803 = vmatprep.mubr.bf16.mxu0 %v482
      %804 = vmatmul.mubr.bf16.gmra.mrb[0].mxu0 %v481
      %v805 = vpop.f32.mrb[0].mxu0
      %v806 = vadd.f32 %v289, %v805
      %v807 = vpop.f32.mrb[0].mxu0
      %v808 = vpop.f32.mrb[0].mxu0
      %v809 = vadd.f32 %v289, %v808
      %v810 = vpop.f32.mrb[0].mxu0
      %811 = vmatprep.mubr.bf16.mxu0 %v485
      %812 = vmatmul.mubr.bf16.gmra.mrb[0].mxu0 %v484
      %v813 = vpop.f32.mrb[0].mxu0
      %v814 = vadd.f32 %v289, %v813
      %v815 = vpop.f32.mrb[0].mxu0
      %v816 = vpop.f32.mrb[0].mxu0
      %v817 = vadd.f32 %v289, %v816
      %v818 = vpop.f32.mrb[0].mxu0
      %819 = vmatprep.mubr.bf16.mxu0 %v488
      %820 = vmatmul.mubr.bf16.gmra.mrb[0].mxu0 %v487
      %v821 = vpop.f32.mrb[0].mxu0
      %v822 = vadd.f32 %v289, %v821
      %v823 = vpop.f32.mrb[0].mxu0
      %v824 = vpop.f32.mrb[0].mxu0
      %v825 = vadd.f32 %v289, %v824
      %v826 = vpop.f32.mrb[0].mxu0
      %827 = vmatprep.mubr.bf16.mxu0 %v491
      %828 = vmatmul.mubr.bf16.gmra.mrb[0].mxu0 %v490
      %v829 = vpop.f32.mrb[0].mxu0
      %v830 = vadd.f32 %v289, %v829
      %v831 = vpop.f32.mrb[0].mxu0
      %v832 = vpop.f32.mrb[0].mxu0
      %v833 = vadd.f32 %v289, %v832
      %v834 = vpop.f32.mrb[0].mxu0
      %835 = vmatprep.mubr.bf16.mxu0 %v494
      %836 = vmatmul.mubr.bf16.gmra.mrb[0].mxu0 %v493
      %v837 = vpop.f32.mrb[0].mxu0
      %v838 = vadd.f32 %v289, %v837
      %v839 = vpop.f32.mrb[0].mxu0
      %v840 = vpop.f32.mrb[0].mxu0
      %v841 = vadd.f32 %v289, %v840
      %v842 = vpop.f32.mrb[0].mxu0
      %843 = vmatprep.mubr.bf16.mxu0 %v497
      %844 = vmatmul.mubr.bf16.gmra.mrb[0].mxu0 %v496
      %v845 = vpop.f32.mrb[0].mxu0
      %v846 = vadd.f32 %v289, %v845
      %v847 = vpop.f32.mrb[0].mxu0
      %v848 = vpop.f32.mrb[0].mxu0
      %v849 = vadd.f32 %v289, %v848
      %v850 = vpop.f32.mrb[0].mxu0
      %851 = vdwg.mxu0
      %852 = vmatprep.subr.bf16.mxu0 0
      %853 = vmatpush1.bf16.msra.mxu0 %v659
      %854 = vmatprep.subr.bf16.mxu0 0
      %855 = vmatpush1.bf16.msra.mxu0 %v660
      %856 = vmatprep.subr.bf16.mxu0 0
      %857 = vmatpush1.bf16.msra.mxu0 %v661
      %858 = vmatprep.subr.bf16.mxu0 0
      %859 = vmatpush1.bf16.msra.mxu0 %v662
      %860 = vmatprep.subr.bf16.mxu0 0
      %861 = vmatpush1.bf16.msra.mxu0 %v663
      %862 = vmatprep.subr.bf16.mxu0 0
      %863 = vmatpush1.bf16.msra.mxu0 %v664
      %864 = vmatprep.subr.bf16.mxu0 0
      %865 = vmatpush1.bf16.msra.mxu0 %v665
      %866 = vmatprep.subr.bf16.mxu0 0
      %867 = vmatpush1.bf16.msra.mxu0 %v666
      %868 = vmatprep.subr.bf16.mxu0 0
      %869 = vmatpush1.bf16.msra.mxu0 0
      %870 = vmatprep.subr.bf16.mxu0 0
      %871 = vmatpush1.bf16.msra.mxu0 0
      %872 = vmatprep.subr.bf16.mxu0 0
      %873 = vmatpush1.bf16.msra.mxu0 0
      %874 = vmatprep.subr.bf16.mxu0 0
      %875 = vmatpush1.bf16.msra.mxu0 0
      %876 = vmatprep.subr.bf16.mxu0 0
      %877 = vmatpush1.bf16.msra.mxu0 0
      %878 = vmatprep.subr.bf16.mxu0 0
      %879 = vmatpush1.bf16.msra.mxu0 0
      %880 = vmatprep.subr.bf16.mxu0 0
      %881 = vmatpush1.bf16.msra.mxu0 0
      %882 = vmatprep.subr.bf16.mxu0 0
      %883 = vmatpush1.bf16.msra.mxu0 0
      %884 = vmatprep.mubr.bf16.mxu0 0
      %885 = vmatmul.mubr.bf16.gmra.mrb[0].mxu0 %v453
      %v886 = vpop.f32.mrb[0].mxu0
      %v887 = vadd.f32 %v726, %v886
      %v888 = vpop.f32.mrb[0].mxu0
      %v889 = vpop.f32.mrb[0].mxu0
      %v890 = vadd.f32 %v729, %v889
      %v891 = vpop.f32.mrb[0].mxu0
      %892 = vmatprep.mubr.bf16.mxu0 0
      %893 = vmatmul.mubr.bf16.gmra.mrb[0].mxu0 %v456
      %v894 = vpop.f32.mrb[0].mxu0
      %v895 = vadd.f32 %v734, %v894
      %v896 = vpop.f32.mrb[0].mxu0
      %v897 = vpop.f32.mrb[0].mxu0
      %v898 = vadd.f32 %v737, %v897
      %v899 = vpop.f32.mrb[0].mxu0
      %900 = vmatprep.mubr.bf16.mxu0 0
      %901 = vmatmul.mubr.bf16.gmra.mrb[0].mxu0 %v459
      %v902 = vpop.f32.mrb[0].mxu0
      %v903 = vadd.f32 %v742, %v902
      %v904 = vpop.f32.mrb[0].mxu0
      %v905 = vpop.f32.mrb[0].mxu0
      %v906 = vadd.f32 %v745, %v905
      %v907 = vpop.f32.mrb[0].mxu0
      %908 = vmatprep.mubr.bf16.mxu0 0
      %909 = vmatmul.mubr.bf16.gmra.mrb[0].mxu0 %v462
      %v910 = vpop.f32.mrb[0].mxu0
      %v911 = vadd.f32 %v750, %v910
      %v912 = vpop.f32.mrb[0].mxu0
      %v913 = vpop.f32.mrb[0].mxu0
      %v914 = vadd.f32 %v753, %v913
      %v915 = vpop.f32.mrb[0].mxu0
      %916 = vmatprep.mubr.bf16.mxu0 0
      %917 = vmatmul.mubr.bf16.gmra.mrb[0].mxu0 %v465
      %v918 = vpop.f32.mrb[0].mxu0
      %v919 = vadd.f32 %v758, %v918
      %v920 = vpop.f32.mrb[0].mxu0
      %v921 = vpop.f32.mrb[0].mxu0
      %v922 = vadd.f32 %v761, %v921
      %v923 = vpop.f32.mrb[0].mxu0
      %924 = vmatprep.mubr.bf16.mxu0 0
      %925 = vmatmul.mubr.bf16.gmra.mrb[0].mxu0 %v468
      %v926 = vpop.f32.mrb[0].mxu0
      %v927 = vadd.f32 %v766, %v926
      %v928 = vpop.f32.mrb[0].mxu0
      %v929 = vpop.f32.mrb[0].mxu0
      %v930 = vadd.f32 %v769, %v929
      %v931 = vpop.f32.mrb[0].mxu0
      %932 = vmatprep.mubr.bf16.mxu0 0
      %933 = vmatmul.mubr.bf16.gmra.mrb[0].mxu0 %v471
      %v934 = vpop.f32.mrb[0].mxu0
      %v935 = vadd.f32 %v774, %v934
      %v936 = vpop.f32.mrb[0].mxu0
      %v937 = vpop.f32.mrb[0].mxu0
      %v938 = vadd.f32 %v777, %v937
      %v939 = vpop.f32.mrb[0].mxu0
      %940 = vmatprep.mubr.bf16.mxu0 0
      %941 = vmatmul.mubr.bf16.gmra.mrb[0].mxu0 %v474
      %v942 = vpop.f32.mrb[0].mxu0
      %v943 = vadd.f32 %v782, %v942
      %v944 = vpop.f32.mrb[0].mxu0
      %v945 = vpop.f32.mrb[0].mxu0
      %v946 = vadd.f32 %v785, %v945
      %v947 = vpop.f32.mrb[0].mxu0
      %948 = vmatprep.mubr.bf16.mxu0 0
      %949 = vmatmul.mubr.bf16.gmra.mrb[0].mxu0 %v477
      %v950 = vpop.f32.mrb[0].mxu0
      %v951 = vadd.f32 %v790, %v950
      %v952 = vpop.f32.mrb[0].mxu0
      %v953 = vpop.f32.mrb[0].mxu0
      %v954 = vadd.f32 %v793, %v953
      %v955 = vpop.f32.mrb[0].mxu0
      %956 = vmatprep.mubr.bf16.mxu0 0
      %957 = vmatmul.mubr.bf16.gmra.mrb[0].mxu0 %v480
      %v958 = vpop.f32.mrb[0].mxu0
      %v959 = vadd.f32 %v798, %v958
      %v960 = vpop.f32.mrb[0].mxu0
      %v961 = vpop.f32.mrb[0].mxu0
      %v962 = vadd.f32 %v801, %v961
      %v963 = vpop.f32.mrb[0].mxu0
      %964 = vmatprep.mubr.bf16.mxu0 0
      %965 = vmatmul.mubr.bf16.gmra.mrb[0].mxu0 %v483
      %v966 = vpop.f32.mrb[0].mxu0
      %v967 = vadd.f32 %v806, %v966
      %v968 = vpop.f32.mrb[0].mxu0
      %v969 = vpop.f32.mrb[0].mxu0
      %v970 = vadd.f32 %v809, %v969
      %v971 = vpop.f32.mrb[0].mxu0
      %972 = vmatprep.mubr.bf16.mxu0 0
      %973 = vmatmul.mubr.bf16.gmra.mrb[0].mxu0 %v486
      %v974 = vpop.f32.mrb[0].mxu0
      %v975 = vadd.f32 %v814, %v974
      %v976 = vpop.f32.mrb[0].mxu0
      %v977 = vpop.f32.mrb[0].mxu0
      %v978 = vadd.f32 %v817, %v977
      %v979 = vpop.f32.mrb[0].mxu0
      %980 = vmatprep.mubr.bf16.mxu0 0
      %981 = vmatmul.mubr.bf16.gmra.mrb[0].mxu0 %v489
      %v982 = vpop.f32.mrb[0].mxu0
      %v983 = vadd.f32 %v822, %v982
      %v984 = vpop.f32.mrb[0].mxu0
      %v985 = vpop.f32.mrb[0].mxu0
      %v986 = vadd.f32 %v825, %v985
      %v987 = vpop.f32.mrb[0].mxu0
      %988 = vmatprep.mubr.bf16.mxu0 0
      %989 = vmatmul.mubr.bf16.gmra.mrb[0].mxu0 %v492
      %v990 = vpop.f32.mrb[0].mxu0
      %v991 = vadd.f32 %v830, %v990
      %v992 = vpop.f32.mrb[0].mxu0
      %v993 = vpop.f32.mrb[0].mxu0
      %v994 = vadd.f32 %v833, %v993
      %v995 = vpop.f32.mrb[0].mxu0
      %996 = vmatprep.mubr.bf16.mxu0 0
      %997 = vmatmul.mubr.bf16.gmra.mrb[0].mxu0 %v495
      %v998 = vpop.f32.mrb[0].mxu0
      %v999 = vadd.f32 %v838, %v998
      %v1000 = vpop.f32.mrb[0].mxu0
      %v1001 = vpop.f32.mrb[0].mxu0
      %v1002 = vadd.f32 %v841, %v1001
      %v1003 = vpop.f32.mrb[0].mxu0
      %1004 = vmatprep.mubr.bf16.mxu0 0
      %1005 = vmatmul.mubr.bf16.gmra.mrb[0].mxu0 %v498
      %v1006 = vpop.f32.mrb[0].mxu0
      %v1007 = vadd.f32 %v846, %v1006
      %v1008 = vpop.f32.mrb[0].mxu0
      %v1009 = vpop.f32.mrb[0].mxu0
      %v1010 = vadd.f32 %v849, %v1009
      %v1011 = vpop.f32.mrb[0].mxu0
      %1012 = vdwg.mxu0
      %v1013 = vadd.f32 %v887, %v890
      %v1014 = vadd.f32 %v1013, %v895
      %v1015 = vadd.f32 %v1014, %v898
      %v1016 = vadd.f32 %v1015, %v903
      %v1017 = vadd.f32 %v1016, %v906
      %v1018 = vadd.f32 %v1017, %v911
      %v1019 = vadd.f32 %v1018, %v914
      %v1020 = vadd.f32 %v1019, %v919
      %v1021 = vadd.f32 %v1020, %v922
      %v1022 = vadd.f32 %v1021, %v927
      %v1023 = vadd.f32 %v1022, %v930
      %v1024 = vadd.f32 %v1023, %v935
      %v1025 = vadd.f32 %v1024, %v938
      %v1026 = vadd.f32 %v1025, %v943
      %v1027 = vadd.f32 %v1026, %v946
      %v1028 = vadd.f32 %v1027, %v951
      %v1029 = vadd.f32 %v1028, %v954
      %v1030 = vadd.f32 %v1029, %v959
      %v1031 = vadd.f32 %v1030, %v962
      %v1032 = vadd.f32 %v1031, %v967
      %v1033 = vadd.f32 %v1032, %v970
      %v1034 = vadd.f32 %v1033, %v975
      %v1035 = vadd.f32 %v1034, %v978
      %v1036 = vadd.f32 %v1035, %v983
      %v1037 = vadd.f32 %v1036, %v986
      %v1038 = vadd.f32 %v1037, %v991
      %v1039 = vadd.f32 %v1038, %v994
      %v1040 = vadd.f32 %v1039, %v999
      %v1041 = vadd.f32 %v1040, %v1002
      %v1042 = vadd.f32 %v1041, %v1007
      %v1043 = vadd.f32 %v1042, %v1010
      %v1044 = vrot.slane %v1043, 4
      %v1045 = vadd.f32 %v1043, %v1044
      %v1046 = vrot.slane %v1045, 2
      %v1047 = vadd.f32 %v1045, %v1046
      %v1048 = vrot.slane %v1047, 1
      %v1049 = vadd.f32 %v1047, %v1048
      %v1050 = vrcp.pop 256.0
      %v1051 = vmul.f32 %v1049, %v1050
      %v1052 = vsub.f32 %v887, %v1051
      %v1053 = vsub.f32 %v890, %v1051
      %v1054 = vsub.f32 %v895, %v1051
      %v1055 = vsub.f32 %v898, %v1051
      %v1056 = vsub.f32 %v903, %v1051
      %v1057 = vsub.f32 %v906, %v1051
      %v1058 = vsub.f32 %v911, %v1051
      %v1059 = vsub.f32 %v914, %v1051
      %v1060 = vsub.f32 %v919, %v1051
      %v1061 = vsub.f32 %v922, %v1051
      %v1062 = vsub.f32 %v927, %v1051
      %v1063 = vsub.f32 %v930, %v1051
      %v1064 = vsub.f32 %v935, %v1051
      %v1065 = vsub.f32 %v938, %v1051
      %v1066 = vsub.f32 %v943, %v1051
      %v1067 = vsub.f32 %v946, %v1051
      %v1068 = vsub.f32 %v951, %v1051
      %v1069 = vsub.f32 %v954, %v1051
      %v1070 = vsub.f32 %v959, %v1051
      %v1071 = vsub.f32 %v962, %v1051
      %v1072 = vsub.f32 %v967, %v1051
      %v1073 = vsub.f32 %v970, %v1051
      %v1074 = vsub.f32 %v975, %v1051
      %v1075 = vsub.f32 %v978, %v1051
      %v1076 = vsub.f32 %v983, %v1051
      %v1077 = vsub.f32 %v986, %v1051
      %v1078 = vsub.f32 %v991, %v1051
      %v1079 = vsub.f32 %v994, %v1051
      %v1080 = vsub.f32 %v999, %v1051
      %v1081 = vsub.f32 %v1002, %v1051
      %v1082 = vsub.f32 %v1007, %v1051
      %v1083 = vsub.f32 %v1010, %v1051
      %v1084 = vmul.f32 %v1052, %v1052
      %v1085 = vmul.f32 %v1053, %v1053
      %v1086 = vmul.f32 %v1054, %v1054
      %v1087 = vmul.f32 %v1055, %v1055
      %v1088 = vmul.f32 %v1056, %v1056
      %v1089 = vmul.f32 %v1057, %v1057
      %v1090 = vmul.f32 %v1058, %v1058
      %v1091 = vmul.f32 %v1059, %v1059
      %v1092 = vmul.f32 %v1060, %v1060
      %v1093 = vmul.f32 %v1061, %v1061
      %v1094 = vmul.f32 %v1062, %v1062
      %v1095 = vmul.f32 %v1063, %v1063
      %v1096 = vmul.f32 %v1064, %v1064
      %v1097 = vmul.f32 %v1065, %v1065
      %v1098 = vmul.f32 %v1066, %v1066
      %v1099 = vmul.f32 %v1067, %v1067
      %v1100 = vmul.f32 %v1068, %v1068
      %v1101 = vmul.f32 %v1069, %v1069
      %v1102 = vmul.f32 %v1070, %v1070
      %v1103 = vmul.f32 %v1071, %v1071
      %v1104 = vmul.f32 %v1072, %v1072
      %v1105 = vmul.f32 %v1073, %v1073
      %v1106 = vmul.f32 %v1074, %v1074
      %v1107 = vmul.f32 %v1075, %v1075
      %v1108 = vmul.f32 %v1076, %v1076
      %v1109 = vmul.f32 %v1077, %v1077
      %v1110 = vmul.f32 %v1078, %v1078
      %v1111 = vmul.f32 %v1079, %v1079
      %v1112 = vmul.f32 %v1080, %v1080
      %v1113 = vmul.f32 %v1081, %v1081
      %v1114 = vmul.f32 %v1082, %v1082
      %v1115 = vmul.f32 %v1083, %v1083
      %v1116 = vadd.f32 %v1084, %v1085
      %v1117 = vadd.f32 %v1116, %v1086
      %v1118 = vadd.f32 %v1117, %v1087
      %v1119 = vadd.f32 %v1118, %v1088
      %v1120 = vadd.f32 %v1119, %v1089
      %v1121 = vadd.f32 %v1120, %v1090
      %v1122 = vadd.f32 %v1121, %v1091
      %v1123 = vadd.f32 %v1122, %v1092
      %v1124 = vadd.f32 %v1123, %v1093
      %v1125 = vadd.f32 %v1124, %v1094
      %v1126 = vadd.f32 %v1125, %v1095
      %v1127 = vadd.f32 %v1126, %v1096
      %v1128 = vadd.f32 %v1127, %v1097
      %v1129 = vadd.f32 %v1128, %v1098
      %v1130 = vadd.f32 %v1129, %v1099
      %v1131 = vadd.f32 %v1130, %v1100
      %v1132 = vadd.f32 %v1131, %v1101
      %v1133 = vadd.f32 %v1132, %v1102
      %v1134 = vadd.f32 %v1133, %v1103
      %v1135 = vadd.f32 %v1134, %v1104
      %v1136 = vadd.f32 %v1135, %v1105
      %v1137 = vadd.f32 %v1136, %v1106
      %v1138 = vadd.f32 %v1137, %v1107
      %v1139 = vadd.f32 %v1138, %v1108
      %v1140 = vadd.f32 %v1139, %v1109
      %v1141 = vadd.f32 %v1140, %v1110
      %v1142 = vadd.f32 %v1141, %v1111
      %v1143 = vadd.f32 %v1142, %v1112
      %v1144 = vadd.f32 %v1143, %v1113
      %v1145 = vadd.f32 %v1144, %v1114
      %v1146 = vadd.f32 %v1145, %v1115
      %v1147 = vrot.slane %v1146, 4
      %v1148 = vadd.f32 %v1146, %v1147
      %v1149 = vrot.slane %v1148, 2
      %v1150 = vadd.f32 %v1148, %v1149
      %v1151 = vrot.slane %v1150, 1
      %v1152 = vadd.f32 %v1150, %v1151
      %v1153 = vmul.f32 %v1152, %v1050
      %v1154 = vadd.f32 %v1153, 1e-05
      %v1155 = vrsqrt.pop %v1154
      %v1156 = vmul.f32 %v1052, %v1155
      %v1157 = vmul.f32 %v1053, %v1155
      %v1158 = vmul.f32 %v1054, %v1155
      %v1159 = vmul.f32 %v1055, %v1155
      %v1160 = vmul.f32 %v1056, %v1155
      %v1161 = vmul.f32 %v1057, %v1155
      %v1162 = vmul.f32 %v1058, %v1155
      %v1163 = vmul.f32 %v1059, %v1155
      %v1164 = vmul.f32 %v1060, %v1155
      %v1165 = vmul.f32 %v1061, %v1155
      %v1166 = vmul.f32 %v1062, %v1155
      %v1167 = vmul.f32 %v1063, %v1155
      %v1168 = vmul.f32 %v1064, %v1155
      %v1169 = vmul.f32 %v1065, %v1155
      %v1170 = vmul.f32 %v1066, %v1155
      %v1171 = vmul.f32 %v1067, %v1155
      %v1172 = vmul.f32 %v1068, %v1155
      %v1173 = vmul.f32 %v1069, %v1155
      %v1174 = vmul.f32 %v1070, %v1155
      %v1175 = vmul.f32 %v1071, %v1155
      %v1176 = vmul.f32 %v1072, %v1155
      %v1177 = vmul.f32 %v1073, %v1155
      %v1178 = vmul.f32 %v1074, %v1155
      %v1179 = vmul.f32 %v1075, %v1155
      %v1180 = vmul.f32 %v1076, %v1155
      %v1181 = vmul.f32 %v1077, %v1155
      %v1182 = vmul.f32 %v1078, %v1155
      %v1183 = vmul.f32 %v1079, %v1155
      %v1184 = vmul.f32 %v1080, %v1155
      %v1185 = vmul.f32 %v1081, %v1155
      %v1186 = vmul.f32 %v1082, %v1155
      %v1187 = vmul.f32 %v1083, %v1155
      %vm1188 = vcmp.gt.f32.partialorder %v1156, 0.0
      %vm1189 = vcmp.gt.f32.partialorder %v1157, 0.0
      %vm1190 = vcmp.gt.f32.partialorder %v1158, 0.0
      %vm1191 = vcmp.gt.f32.partialorder %v1159, 0.0
      %vm1192 = vcmp.gt.f32.partialorder %v1160, 0.0
      %vm1193 = vcmp.gt.f32.partialorder %v1161, 0.0
      %vm1194 = vcmp.gt.f32.partialorder %v1162, 0.0
      %vm1195 = vcmp.gt.f32.partialorder %v1163, 0.0
      %vm1196 = vcmp.gt.f32.partialorder %v1164, 0.0
      %vm1197 = vcmp.gt.f32.partialorder %v1165, 0.0
      %vm1198 = vcmp.gt.f32.partialorder %v1166, 0.0
      %vm1199 = vcmp.gt.f32.partialorder %v1167, 0.0
      %vm1200 = vcmp.gt.f32.partialorder %v1168, 0.0
      %vm1201 = vcmp.gt.f32.partialorder %v1169, 0.0
      %vm1202 = vcmp.gt.f32.partialorder %v1170, 0.0
      %vm1203 = vcmp.gt.f32.partialorder %v1171, 0.0
      %vm1204 = vcmp.gt.f32.partialorder %v1172, 0.0
      %vm1205 = vcmp.gt.f32.partialorder %v1173, 0.0
      %vm1206 = vcmp.gt.f32.partialorder %v1174, 0.0
      %vm1207 = vcmp.gt.f32.partialorder %v1175, 0.0
      %vm1208 = vcmp.gt.f32.partialorder %v1176, 0.0
      %vm1209 = vcmp.gt.f32.partialorder %v1177, 0.0
      %vm1210 = vcmp.gt.f32.partialorder %v1178, 0.0
      %vm1211 = vcmp.gt.f32.partialorder %v1179, 0.0
      %vm1212 = vcmp.gt.f32.partialorder %v1180, 0.0
      %vm1213 = vcmp.gt.f32.partialorder %v1181, 0.0
      %vm1214 = vcmp.gt.f32.partialorder %v1182, 0.0
      %vm1215 = vcmp.gt.f32.partialorder %v1183, 0.0
      %vm1216 = vcmp.gt.f32.partialorder %v1184, 0.0
      %vm1217 = vcmp.gt.f32.partialorder %v1185, 0.0
      %vm1218 = vcmp.gt.f32.partialorder %v1186, 0.0
      %vm1219 = vcmp.gt.f32.partialorder %v1187, 0.0
      %v1220 = vmul.f32 %v1156, 0.2
      %v1221 = vmul.f32 %v1157, 0.2
      %v1222 = vmul.f32 %v1158, 0.2
      %v1223 = vmul.f32 %v1159, 0.2
      %v1224 = vmul.f32 %v1160, 0.2
      %v1225 = vmul.f32 %v1161, 0.2
      %v1226 = vmul.f32 %v1162, 0.2
      %v1227 = vmul.f32 %v1163, 0.2
      %v1228 = vmul.f32 %v1164, 0.2
      %v1229 = vmul.f32 %v1165, 0.2
      %v1230 = vmul.f32 %v1166, 0.2
      %v1231 = vmul.f32 %v1167, 0.2
      %v1232 = vmul.f32 %v1168, 0.2
      %v1233 = vmul.f32 %v1169, 0.2
      %v1234 = vmul.f32 %v1170, 0.2
      %v1235 = vmul.f32 %v1171, 0.2
      %v1236 = vmul.f32 %v1172, 0.2
      %v1237 = vmul.f32 %v1173, 0.2
      %v1238 = vmul.f32 %v1174, 0.2
      %v1239 = vmul.f32 %v1175, 0.2
      %v1240 = vmul.f32 %v1176, 0.2
      %v1241 = vmul.f32 %v1177, 0.2
      %v1242 = vmul.f32 %v1178, 0.2
      %v1243 = vmul.f32 %v1179, 0.2
      %v1244 = vmul.f32 %v1180, 0.2
      %v1245 = vmul.f32 %v1181, 0.2
      %v1246 = vmul.f32 %v1182, 0.2
      %v1247 = vmul.f32 %v1183, 0.2
      %v1248 = vmul.f32 %v1184, 0.2
      %v1249 = vmul.f32 %v1185, 0.2
      %v1250 = vmul.f32 %v1186, 0.2
      %v1251 = vmul.f32 %v1187, 0.2
      %v1252 = vsel %vm1188, %v1156, %v1220
      %v1253 = vsel %vm1189, %v1157, %v1221
      %v1254 = vsel %vm1190, %v1158, %v1222
      %v1255 = vsel %vm1191, %v1159, %v1223
      %v1256 = vsel %vm1192, %v1160, %v1224
      %v1257 = vsel %vm1193, %v1161, %v1225
      %v1258 = vsel %vm1194, %v1162, %v1226
      %v1259 = vsel %vm1195, %v1163, %v1227
      %v1260 = vsel %vm1196, %v1164, %v1228
      %v1261 = vsel %vm1197, %v1165, %v1229
      %v1262 = vsel %vm1198, %v1166, %v1230
      %v1263 = vsel %vm1199, %v1167, %v1231
      %v1264 = vsel %vm1200, %v1168, %v1232
      %v1265 = vsel %vm1201, %v1169, %v1233
      %v1266 = vsel %vm1202, %v1170, %v1234
      %v1267 = vsel %vm1203, %v1171, %v1235
      %v1268 = vsel %vm1204, %v1172, %v1236
      %v1269 = vsel %vm1205, %v1173, %v1237
      %v1270 = vsel %vm1206, %v1174, %v1238
      %v1271 = vsel %vm1207, %v1175, %v1239
      %v1272 = vsel %vm1208, %v1176, %v1240
      %v1273 = vsel %vm1209, %v1177, %v1241
      %v1274 = vsel %vm1210, %v1178, %v1242
      %v1275 = vsel %vm1211, %v1179, %v1243
      %v1276 = vsel %vm1212, %v1180, %v1244
      %v1277 = vsel %vm1213, %v1181, %v1245
      %v1278 = vsel %vm1214, %v1182, %v1246
      %v1279 = vsel %vm1215, %v1183, %v1247
      %v1280 = vsel %vm1216, %v1184, %v1248
      %v1281 = vsel %vm1217, %v1185, %v1249
      %v1282 = vsel %vm1218, %v1186, %v1250
      %v1283 = vsel %vm1219, %v1187, %v1251
      %1284 = vst [vmem:[%s170] sm:$0xff] %v1252
      %1285 = vst [vmem:[%s170 + $0x8] sm:$0xff] %v1253
      %1286 = vst [vmem:[%s170 + $0x10] sm:$0xff] %v1254
      %1287 = vst [vmem:[%s170 + $0x18] sm:$0xff] %v1255
      %1288 = vst [vmem:[%s170 + $0x20] sm:$0xff] %v1256
      %1289 = vst [vmem:[%s170 + $0x28] sm:$0xff] %v1257
      %1290 = vst [vmem:[%s170 + $0x30] sm:$0xff] %v1258
      %1291 = vst [vmem:[%s170 + $0x38] sm:$0xff] %v1259
      %1292 = vst [vmem:[%s170 + $0x40] sm:$0xff] %v1260
      %1293 = vst [vmem:[%s170 + $0x48] sm:$0xff] %v1261
      %1294 = vst [vmem:[%s170 + $0x50] sm:$0xff] %v1262
      %1295 = vst [vmem:[%s170 + $0x58] sm:$0xff] %v1263
      %1296 = vst [vmem:[%s170 + $0x60] sm:$0xff] %v1264
      %1297 = vst [vmem:[%s170 + $0x68] sm:$0xff] %v1265
      %1298 = vst [vmem:[%s170 + $0x70] sm:$0xff] %v1266
      %1299 = vst [vmem:[%s170 + $0x78] sm:$0xff] %v1267
      %1300 = vst [vmem:[%s170 + $0x80] sm:$0xff] %v1268
      %1301 = vst [vmem:[%s170 + $0x88] sm:$0xff] %v1269
      %1302 = vst [vmem:[%s170 + $0x90] sm:$0xff] %v1270
      %1303 = vst [vmem:[%s170 + $0x98] sm:$0xff] %v1271
      %1304 = vst [vmem:[%s170 + $0xa0] sm:$0xff] %v1272
      %1305 = vst [vmem:[%s170 + $0xa8] sm:$0xff] %v1273
      %1306 = vst [vmem:[%s170 + $0xb0] sm:$0xff] %v1274
      %1307 = vst [vmem:[%s170 + $0xb8] sm:$0xff] %v1275
      %1308 = vst [vmem:[%s170 + $0xc0] sm:$0xff] %v1276
      %1309 = vst [vmem:[%s170 + $0xc8] sm:$0xff] %v1277
      %1310 = vst [vmem:[%s170 + $0xd0] sm:$0xff] %v1278
      %1311 = vst [vmem:[%s170 + $0xd8] sm:$0xff] %v1279
      %1312 = vst [vmem:[%s170 + $0xe0] sm:$0xff] %v1280
      %1313 = vst [vmem:[%s170 + $0xe8] sm:$0xff] %v1281
      %1314 = vst [vmem:[%s170 + $0xf0] sm:$0xff] %v1282
      %1315 = vst [vmem:[%s170 + $0xf8] sm:$0xff] %v1283
      %p1316 = scmp.lt.s32.totalorder %s14, 1
      %s1317 = scalar_select %p1316, %s14, 1
      %s1318 = smul.addr %s1317, 32
      %s1319 = smul.addr %s1318, 8
      %s1320 = scalar_lea.vmem %s3, %s1319
      // Predicated region
      $region33: #{masknet_forward.3} parent=31 // pred_check
        %p1321 = pneg %p100
      $region34: #{masknet_forward.3} parent=31 // pred_check_branch
        %1323 = sbr.rel (%p1321) target = $region36
      $region35: #{masknet_forward.3} parent=31 // pred_region
        _
      $region36: #{masknet_forward.3} parent=31 // pred_fallthru
        _
    $region32: #{masknet_forward.3} parent=5 // pred_fallthru
      _
    %p1324 = scmp.le.s32.totalorder 2, %s9
    // Predicated region
    $region37: #{masknet_forward.3} parent=5 // pred_check
      %p1325 = pneg %p1324
    $region38: #{masknet_forward.3} parent=5 // pred_check_branch
      %1327 = sbr.rel (%p1325) target = $region40
    $region39: #{masknet_forward.3} parent=5 // pred_region
      %s1328 = ssub.s32 %s9, 2
      // Predicated region
      $region41: #{masknet_forward.3} parent=39 // pred_check
        %p1329 = pneg %p106
      $region42: #{masknet_forward.3} parent=39 // pred_check_branch
        %1331 = sbr.rel (%p1329) target = $region44
      $region43: #{masknet_forward.3} parent=39 // pred_region
        %p1332 = scmp.lt.s32.totalorder %s15, 1
        %s1333 = scalar_select %p1332, %s15, 1
        %s1334 = smul.addr %s1333, 32
        %s1335 = smul.addr %s1334, 8
        %s1336 = scalar_lea.vmem %s3, %s1335
      $region44: #{masknet_forward.3} parent=39 // pred_fallthru
        _
    $region40: #{masknet_forward.3} parent=5 // pred_fallthru
      _
  $region6: #{masknet_forward.3} parent=0 // loop_footer
    %s13 = sadd.s32 1, %s9
  $region7: #{masknet_forward.3} parent=0 // loop_footer_branch
    %8 = sbr.rel target = $region3
  $region8: #{masknet_forward.3} parent=0 // loop_exit
    _

// kernel: masknet_forward.5
$region0: #{masknet_forward.5}
  #allocation0 [shape = 'u32[]', space=smem, size = 0x4, offset = 0x4, fixed_abs, tag = 'smem constant byte address 0x4 - core index']
  #allocation1 [shape = 'u32[144,128]{1,0:T(1,128)}', space=vmem, size = 0x12000, scoped, tag = 'internal scratch']
  %s0 = inlined_call_operand.vmem [shape: bf16[2,256,384], index: 0, kind: input, shape index: {}]
  %s1 = inlined_call_operand.vmem [shape: bf16[384,128], index: 1, kind: input, shape index: {}]
  %s2 = inlined_call_operand.vmem [shape: f32[1,128], index: 2, kind: input, shape index: {}]
  %s3 = inlined_call_operand.vmem [shape: f32[2,256,128], index: 3, kind: output, shape index: {}]
  %s4 = sld [smem:[#allocation0]]
  $region45: #{masknet_forward.5} parent=0
    _
  %s6 = ssub.s32 1, %s4
  %s7 = scalar_select 0, %s6, %s4
  loop: start=0, step=1, limit=4
  $region2: #{masknet_forward.5} parent=0 // loop_pre_header
    _
  $region3: #{masknet_forward.5} parent=0 // loop_header
    %s9 = sphi 0, %s13
    %p10 = scmp.ge.s32.totalorder %s9, 4
    %s19 = sphi 0, %s21
    %s22 = sphi 0, %s19
    %s23 = sphi 0, %s22
    %s39 = sphi 0, %s23
    %s43 = sphi 0, %s43
    %s45 = sphi 0, %s43
    %s46 = sphi 0, %s45
    %s60 = sphi 0, %s46
    %s64 = sphi 0, %s64
    %s66 = sphi 0, %s64
    %s67 = sphi 0, %s66
    %s81 = sphi 0, %s67
    %s87 = sphi 0, %s89
    %s90 = sphi 0, %s87
    %s91 = sphi 0, %s90
    %s107 = sphi 0, %s91
  $region4: #{masknet_forward.5} parent=0 // loop_header_branch
    %12 = sbr.rel (%p10) target = $region8
  $region5: #{masknet_forward.5} parent=0 // loop_body
    %s14 = ssub.s32 %s9, 1
    %s15 = ssub.s32 %s9, 2
    %s16 = sadd.s32 %s9, 1
    %s17 = ssub.s32 %s9, %s16
    %p18 = scmp.eq.s32.totalorder %s17, 0
    %s20 = sadd.s32 %s19, 1
    %s21 = scalar_select %p18, %s19, %s20
    %p24 = pneg %p18
    %p25 = scmp.eq.s32.totalorder %s9, 1
    %p26 = por %p24, %p25
    %p27 = scmp.ne.s32.totalorder %s19, %s22
    %p28 = scmp.eq.s32.totalorder %s9, 0
    %p29 = por %p27, %p28
    %p30 = scmp.ne.s32.totalorder %s19, %s22
    %p31 = scmp.eq.s32.totalorder %s14, 1
    %p32 = por %p30, %p31
    %p33 = scmp.ne.s32.totalorder %s22, %s23
    %p34 = scmp.eq.s32.totalorder %s14, 0
    %p35 = por %p33, %p34
    %p36 = scmp.ne.s32.totalorder %s22, %s23
    %p37 = scmp.eq.s32.totalorder %s15, 1
    %p38 = por %p36, %p37
    %p40 = scmp.ne.s32.totalorder %s23, %s39
    %p41 = scmp.eq.s32.totalorder %s15, 0
    %p42 = por %p40, %p41
    %s44 = sadd.s32 %s43, 1
    %p47 = scmp.eq.s32.totalorder %s9, 1
    %p48 = scmp.ne.s32.totalorder %s43, %s45
    %p49 = scmp.eq.s32.totalorder %s9, 0
    %p50 = por %p48, %p49
    %p51 = scmp.ne.s32.totalorder %s43, %s45
    %p52 = scmp.eq.s32.totalorder %s14, 1
    %p53 = por %p51, %p52
    %p54 = scmp.ne.s32.totalorder %s45, %s46
    %p55 = scmp.eq.s32.totalorder %s14, 0
    %p56 = por %p54, %p55
    %p57 = scmp.ne.s32.totalorder %s45, %s46
    %p58 = scmp.eq.s32.totalorder %s15, 1
    %p59 = por %p57, %p58
    %p61 = scmp.ne.s32.totalorder %s46, %s60
    %p62 = scmp.eq.s32.totalorder %s15, 0
    %p63 = por %p61, %p62
    %s65 = sadd.s32 %s64, 1
    %p68 = scmp.eq.s32.totalorder %s9, 1
    %p69 = scmp.ne.s32.totalorder %s64, %s66
    %p70 = scmp.eq.s32.totalorder %s9, 0
    %p71 = por %p69, %p70
    %p72 = scmp.ne.s32.totalorder %s64, %s66
    %p73 = scmp.eq.s32.totalorder %s14, 1
    %p74 = por %p72, %p73
    %p75 = scmp.ne.s32.totalorder %s66, %s67
    %p76 = scmp.eq.s32.totalorder %s14, 0
    %p77 = por %p75, %p76
    %p78 = scmp.ne.s32.totalorder %s66, %s67
    %p79 = scmp.eq.s32.totalorder %s15, 1
    %p80 = por %p78, %p79
    %p82 = scmp.ne.s32.totalorder %s67, %s81
    %p83 = scmp.eq.s32.totalorder %s15, 0
    %p84 = por %p82, %p83
    %s85 = ssub.s32 %s9, %s16
    %p86 = scmp.eq.s32.totalorder %s85, 0
    %s88 = sadd.s32 %s87, 1
    %s89 = scalar_select %p86, %s87, %s88
    %p92 = pneg %p86
    %p93 = scmp.eq.s32.totalorder %s9, 1
    %p94 = por %p92, %p93
    %p95 = scmp.ne.s32.totalorder %s87, %s90
    %p96 = scmp.eq.s32.totalorder %s9, 0
    %p97 = por %p95, %p96
    %p98 = scmp.ne.s32.totalorder %s87, %s90
    %p99 = scmp.eq.s32.totalorder %s14, 1
    %p100 = por %p98, %p99
    %p101 = scmp.ne.s32.totalorder %s90, %s91
    %p102 = scmp.eq.s32.totalorder %s14, 0
    %p103 = por %p101, %p102
    %p104 = scmp.ne.s32.totalorder %s90, %s91
    %p105 = scmp.eq.s32.totalorder %s15, 1
    %p106 = por %p104, %p105
    %p108 = scmp.ne.s32.totalorder %s91, %s107
    %p109 = scmp.eq.s32.totalorder %s15, 0
    %p110 = por %p108, %p109
    %p111 = scmp.le.s32.totalorder 1, %s9
    %p112 = scmp.lt.s32.totalorder %s9, 3
    %p113 = pnand %p111, %p112
    %p114 = pneg %p113
    // Predicated region
    $region9: #{masknet_forward.5} parent=5 // pred_check
      _
    $region10: #{masknet_forward.5} parent=5 // pred_check_branch
      %116 = sbr.rel (%p113) target = $region12
    $region11: #{masknet_forward.5} parent=5 // pred_region
      %s117 = ssub.s32 %s9, 1
      // Predicated region
      $region13: #{masknet_forward.5} parent=11 // pred_check
        %p118 = pneg %p56
      $region14: #{masknet_forward.5} parent=11 // pred_check_branch
        %120 = sbr.rel (%p118) target = $region16
      $region15: #{masknet_forward.5} parent=11 // pred_region
        _
      $region16: #{masknet_forward.5} parent=11 // pred_fallthru
        _
      // Predicated region
      $region17: #{masknet_forward.5} parent=11 // pred_check
        %p121 = pneg %p77
      $region18: #{masknet_forward.5} parent=11 // pred_check_branch
        %123 = sbr.rel (%p121) target = $region20
      $region19: #{masknet_forward.5} parent=11 // pred_region
        _
      $region20: #{masknet_forward.5} parent=11 // pred_fallthru
        _
    $region12: #{masknet_forward.5} parent=5 // pred_fallthru
      _
    %p124 = scmp.lt.s32.totalorder %s9, 2
    // Predicated region
    $region21: #{masknet_forward.5} parent=5 // pred_check
      %p125 = pneg %p124
    $region22: #{masknet_forward.5} parent=5 // pred_check_branch
      %127 = sbr.rel (%p125) target = $region24
    $region23: #{masknet_forward.5} parent=5 // pred_region
      // Predicated region
      $region25: #{masknet_forward.5} parent=23 // pred_check
        %p128 = pneg %p29
      $region26: #{masknet_forward.5} parent=23 // pred_check_branch
        %130 = sbr.rel (%p128) target = $region28
      $region27: #{masknet_forward.5} parent=23 // pred_region
        %p131 = scmp.lt.s32.totalorder %s9, 1
        %s132 = scalar_select %p131, %s9, 1
        %s133 = smul.addr %s132, 96
        %s134 = smul.addr %s133, 4
        %s135 = scalar_lea.vmem %s0, %s134
      $region28: #{masknet_forward.5} parent=23 // pred_fallthru
        _
    $region24: #{masknet_forward.5} parent=5 // pred_fallthru
      _
    %p136 = scmp.le.s32.totalorder 1, %s9
    %p137 = scmp.lt.s32.totalorder %s9, 3
    %p138 = pnand %p136, %p137
    %p139 = pneg %p138
    // Predicated region
    $region29: #{masknet_forward.5} parent=5 // pred_check
      _
    $region30: #{masknet_forward.5} parent=5 // pred_check_branch
      %141 = sbr.rel (%p138) target = $region32
    $region31: #{masknet_forward.5} parent=5 // pred_region
      %s142 = ssub.s32 %s9, 1
      %p143 = scmp.lt.s32.totalorder %s14, 1
      %s144 = scalar_select %p143, %s14, 1
      %s145 = smul.addr %s144, 96
      %s146 = smul.addr %s145, 4
      %s147 = scalar_lea.vmem %s0, %s146
      %p148 = pneg %p35
      %p149 = pneg %p32
      %p150 = pneg %p56
      %p151 = pneg %p53
      %p152 = pneg %p77
      %p153 = pneg %p74
      %p154 = pneg %p103
      %p155 = pneg %p100
      %p156 = scmp.lt.s32.totalorder %s14, 1
      %s157 = scalar_select %p156, %s14, 1
      %s158 = smul.addr %s157, 32
      %s159 = smul.addr %s158, 8
      %s160 = scalar_lea.vmem %s3, %s159
      %p161 = scmp.lt.s32.totalorder %s14, 1
      %s162 = scalar_select %p161, %s14, 1
      %s163 = smul.addr %s162, 96
      %s164 = smul.addr %s163, 4
      %s165 = scalar_lea.vmem %s0, %s164
      %p166 = scmp.lt.s32.totalorder %s14, 1
      %s167 = scalar_select %p166, %s14, 1
      %s168 = smul.addr %s167, 32
      %s169 = smul.addr %s168, 8
      %s170 = scalar_lea.vmem %s3, %s169
      %v172 = vld [vmem:[%s165] sm:$0xff]
      %v173 = vld [vmem:[%s165 + $0x8] sm:$0xf]
      %v174 = vld [vmem:[%s165 + $0xc] sm:$0xff]
      %v175 = vld [vmem:[%s165 + $0x14] sm:$0xf]
      %v176 = vld [vmem:[%s165 + $0x18] sm:$0xff]
      %v177 = vld [vmem:[%s165 + $0x20] sm:$0xf]
      %v178 = vld [vmem:[%s165 + $0x24] sm:$0xff]
      %v179 = vld [vmem:[%s165 + $0x2c] sm:$0xf]
      %v180 = vld [vmem:[%s165 + $0x30] sm:$0xff]
      %v181 = vld [vmem:[%s165 + $0x38] sm:$0xf]
      %v182 = vld [vmem:[%s165 + $0x3c] sm:$0xff]
      %v183 = vld [vmem:[%s165 + $0x44] sm:$0xf]
      %v184 = vld [vmem:[%s165 + $0x48] sm:$0xff]
      %v185 = vld [vmem:[%s165 + $0x50] sm:$0xf]
      %v186 = vld [vmem:[%s165 + $0x54] sm:$0xff]
      %v187 = vld [vmem:[%s165 + $0x5c] sm:$0xf]
      %v188 = vld [vmem:[%s165 + $0x60] sm:$0xff]
      %v189 = vld [vmem:[%s165 + $0x68] sm:$0xf]
      %v190 = vld [vmem:[%s165 + $0x6c] sm:$0xff]
      %v191 = vld [vmem:[%s165 + $0x74] sm:$0xf]
      %v192 = vld [vmem:[%s165 + $0x78] sm:$0xff]
      %v193 = vld [vmem:[%s165 + $0x80] sm:$0xf]
      %v194 = vld [vmem:[%s165 + $0x84] sm:$0xff]
      %v195 = vld [vmem:[%s165 + $0x8c] sm:$0xf]
      %v196 = vld [vmem:[%s165 + $0x90] sm:$0xff]
      %v197 = vld [vmem:[%s165 + $0x98] sm:$0xf]
      %v198 = vld [vmem:[%s165 + $0x9c] sm:$0xff]
      %v199 = vld [vmem:[%s165 + $0xa4] sm:$0xf]
      %v200 = vld [vmem:[%s165 + $0xa8] sm:$0xff]
      %v201 = vld [vmem:[%s165 + $0xb0] sm:$0xf]
      %v202 = vld [vmem:[%s165 + $0xb4] sm:$0xff]
      %v203 = vld [vmem:[%s165 + $0xbc] sm:$0xf]
      %v204 = vld [vmem:[%s165 + $0xc0] sm:$0xff]
      %v205 = vld [vmem:[%s165 + $0xc8] sm:$0xf]
      %v206 = vld [vmem:[%s165 + $0xcc] sm:$0xff]
      %v207 = vld [vmem:[%s165 + $0xd4] sm:$0xf]
      %v208 = vld [vmem:[%s165 + $0xd8] sm:$0xff]
      %v209 = vld [vmem:[%s165 + $0xe0] sm:$0xf]
      %v210 = vld [vmem:[%s165 + $0xe4] sm:$0xff]
      %v211 = vld [vmem:[%s165 + $0xec] sm:$0xf]
      %v212 = vld [vmem:[%s165 + $0xf0] sm:$0xff]
      %v213 = vld [vmem:[%s165 + $0xf8] sm:$0xf]
      %v214 = vld [vmem:[%s165 + $0xfc] sm:$0xff]
      %v215 = vld [vmem:[%s165 + $0x104] sm:$0xf]
      %v216 = vld [vmem:[%s165 + $0x108] sm:$0xff]
      %v217 = vld [vmem:[%s165 + $0x110] sm:$0xf]
      %v218 = vld [vmem:[%s165 + $0x114] sm:$0xff]
      %v219 = vld [vmem:[%s165 + $0x11c] sm:$0xf]
      %v220 = vld [vmem:[%s165 + $0x120] sm:$0xff]
      %v221 = vld [vmem:[%s165 + $0x128] sm:$0xf]
      %v222 = vld [vmem:[%s165 + $0x12c] sm:$0xff]
      %v223 = vld [vmem:[%s165 + $0x134] sm:$0xf]
      %v224 = vld [vmem:[%s165 + $0x138] sm:$0xff]
      %v225 = vld [vmem:[%s165 + $0x140] sm:$0xf]
      %v226 = vld [vmem:[%s165 + $0x144] sm:$0xff]
      %v227 = vld [vmem:[%s165 + $0x14c] sm:$0xf]
      %v228 = vld [vmem:[%s165 + $0x150] sm:$0xff]
      %v229 = vld [vmem:[%s165 + $0x158] sm:$0xf]
      %v230 = vld [vmem:[%s165 + $0x15c] sm:$0xff]
      %v231 = vld [vmem:[%s165 + $0x164] sm:$0xf]
      %v232 = vld [vmem:[%s165 + $0x168] sm:$0xff]
      %v233 = vld [vmem:[%s165 + $0x170] sm:$0xf]
      %v234 = vld [vmem:[%s165 + $0x174] sm:$0xff]
      %v235 = vld [vmem:[%s165 + $0x17c] sm:$0xf]
      %v236 = vld [vmem:[%s1] sm:$0xf]
      %v237 = vld [vmem:[%s1 + $0x4] sm:$0xf]
      %v238 = vld [vmem:[%s1 + $0x8] sm:$0xf]
      %v239 = vld [vmem:[%s1 + $0xc] sm:$0xf]
      %v240 = vld [vmem:[%s1 + $0x10] sm:$0xf]
      %v241 = vld [vmem:[%s1 + $0x14] sm:$0xf]
      %v242 = vld [vmem:[%s1 + $0x18] sm:$0xf]
      %v243 = vld [vmem:[%s1 + $0x1c] sm:$0xf]
      %v244 = vld [vmem:[%s1 + $0x20] sm:$0xf]
      %v245 = vld [vmem:[%s1 + $0x24] sm:$0xf]
      %v246 = vld [vmem:[%s1 + $0x28] sm:$0xf]
      %v247 = vld [vmem:[%s1 + $0x2c] sm:$0xf]
      %v248 = vld [vmem:[%s1 + $0x30] sm:$0xf]
      %v249 = vld [vmem:[%s1 + $0x34] sm:$0xf]
      %v250 = vld [vmem:[%s1 + $0x38] sm:$0xf]
      %v251 = vld [vmem:[%s1 + $0x3c] sm:$0xf]
      %v252 = vld [vmem:[%s1 + $0x40] sm:$0xf]
      %v253 = vld [vmem:[%s1 + $0x44] sm:$0xf]
      %v254 = vld [vmem:[%s1 + $0x48] sm:$0xf]
      %v255 = vld [vmem:[%s1 + $0x4c] sm:$0xf]
      %v256 = vld [vmem:[%s1 + $0x50] sm:$0xf]
      %v257 = vld [vmem:[%s1 + $0x54] sm:$0xf]
      %v258 = vld [vmem:[%s1 + $0x58] sm:$0xf]
      %v259 = vld [vmem:[%s1 + $0x5c] sm:$0xf]
      %v260 = vld [vmem:[%s1 + $0x60] sm:$0xf]
      %v261 = vld [vmem:[%s1 + $0x64] sm:$0xf]
      %v262 = vld [vmem:[%s1 + $0x68] sm:$0xf]
      %v263 = vld [vmem:[%s1 + $0x6c] sm:$0xf]
      %v264 = vld [vmem:[%s1 + $0x70] sm:$0xf]
      %v265 = vld [vmem:[%s1 + $0x74] sm:$0xf]
      %v266 = vld [vmem:[%s1 + $0x78] sm:$0xf]
      %v267 = vld [vmem:[%s1 + $0x7c] sm:$0xf]
      %v268 = vld [vmem:[%s1 + $0x80] sm:$0xf]
      %v269 = vld [vmem:[%s1 + $0x84] sm:$0xf]
      %v270 = vld [vmem:[%s1 + $0x88] sm:$0xf]
      %v271 = vld [vmem:[%s1 + $0x8c] sm:$0xf]
      %v272 = vld [vmem:[%s1 + $0x90] sm:$0xf]
      %v273 = vld [vmem:[%s1 + $0x94] sm:$0xf]
      %v274 = vld [vmem:[%s1 + $0x98] sm:$0xf]
      %v275 = vld [vmem:[%s1 + $0x9c] sm:$0xf]
      %v276 = vld [vmem:[%s1 + $0xa0] sm:$0xf]
      %v277 = vld [vmem:[%s1 + $0xa4] sm:$0xf]
      %v278 = vld [vmem:[%s1 + $0xa8] sm:$0xf]
      %v279 = vld [vmem:[%s1 + $0xac] sm:$0xf]
      %v280 = vld [vmem:[%s1 + $0xb0] sm:$0xf]
      %v281 = vld [vmem:[%s1 + $0xb4] sm:$0xf]
      %v282 = vld [vmem:[%s1 + $0xb8] sm:$0xf]
      %v283 = vld [vmem:[%s1 + $0xbc] sm:$0xf]
      %v284 = vld [vmem:[%s2] sm:$0x1]
      %v286 = vlaneseq
      %v287 = vshrl.u32 %v286, 7
      %v288 = vsub.s32 0, %v287
      %v289 = vrot.slane %v284, %v288
      %v355 = vunpack.c.l.b16 %v172
      %v356 = vunpack.c.h.b16 %v172
      %v357 = vunpack.c.l.b16 %v173
      %v358 = vunpack.c.l.b16 %v174
      %v359 = vunpack.c.h.b16 %v174
      %v360 = vunpack.c.l.b16 %v175
      %v361 = vunpack.c.l.b16 %v176
      %v362 = vunpack.c.h.b16 %v176
      %v363 = vunpack.c.l.b16 %v177
      %v364 = vunpack.c.l.b16 %v178
      %v365 = vunpack.c.h.b16 %v178
      %v366 = vunpack.c.l.b16 %v179
      %v367 = vunpack.c.l.b16 %v180
      %v368 = vunpack.c.h.b16 %v180
      %v369 = vunpack.c.l.b16 %v181
      %v370 = vunpack.c.l.b16 %v182
      %v371 = vunpack.c.h.b16 %v182
      %v372 = vunpack.c.l.b16 %v183
      %v373 = vunpack.c.l.b16 %v184
      %v374 = vunpack.c.h.b16 %v184
      %v375 = vunpack.c.l.b16 %v185
      %v376 = vunpack.c.l.b16 %v186
      %v377 = vunpack.c.h.b16 %v186
      %v378 = vunpack.c.l.b16 %v187
      %v379 = vunpack.c.l.b16 %v188
      %v380 = vunpack.c.h.b16 %v188
      %v381 = vunpack.c.l.b16 %v189
      %v382 = vunpack.c.l.b16 %v190
      %v383 = vunpack.c.h.b16 %v190
      %v384 = vunpack.c.l.b16 %v191
      %v385 = vunpack.c.l.b16 %v192
      %v386 = vunpack.c.h.b16 %v192
      %v387 = vunpack.c.l.b16 %v193
      %v388 = vunpack.c.l.b16 %v194
      %v389 = vunpack.c.h.b16 %v194
      %v390 = vunpack.c.l.b16 %v195
      %v391 = vunpack.c.l.b16 %v196
      %v392 = vunpack.c.h.b16 %v196
      %v393 = vunpack.c.l.b16 %v197
      %v394 = vunpack.c.l.b16 %v198
      %v395 = vunpack.c.h.b16 %v198
      %v396 = vunpack.c.l.b16 %v199
      %v397 = vunpack.c.l.b16 %v200
      %v398 = vunpack.c.h.b16 %v200
      %v399 = vunpack.c.l.b16 %v201
      %v400 = vunpack.c.l.b16 %v202
      %v401 = vunpack.c.h.b16 %v202
      %v402 = vunpack.c.l.b16 %v203
      %v403 = vunpack.c.l.b16 %v204
      %v404 = vunpack.c.h.b16 %v204
      %v405 = vunpack.c.l.b16 %v205
      %v406 = vunpack.c.l.b16 %v206
      %v407 = vunpack.c.h.b16 %v206
      %v408 = vunpack.c.l.b16 %v207
      %v409 = vunpack.c.l.b16 %v208
      %v410 = vunpack.c.h.b16 %v208
      %v411 = vunpack.c.l.b16 %v209
      %v412 = vunpack.c.l.b16 %v210
      %v413 = vunpack.c.h.b16 %v210
      %v414 = vunpack.c.l.b16 %v211
      %v415 = vunpack.c.l.b16 %v212
      %v416 = vunpack.c.h.b16 %v212
      %v417 = vunpack.c.l.b16 %v213
      %v418 = vunpack.c.l.b16 %v214
      %v419 = vunpack.c.h.b16 %v214
      %v420 = vunpack.c.l.b16 %v215
      %v421 = vunpack.c.l.b16 %v216
      %v422 = vunpack.c.h.b16 %v216
      %v423 = vunpack.c.l.b16 %v217
      %v424 = vunpack.c.l.b16 %v218
      %v425 = vunpack.c.h.b16 %v218
      %v426 = vunpack.c.l.b16 %v219
      %v427 = vunpack.c.l.b16 %v220
      %v428 = vunpack.c.h.b16 %v220
      %v429 = vunpack.c.l.b16 %v221
      %v430 = vunpack.c.l.b16 %v222
      %v431 = vunpack.c.h.b16 %v222
      %v432 = vunpack.c.l.b16 %v223
      %v433 = vunpack.c.l.b16 %v224
      %v434 = vunpack.c.h.b16 %v224
      %v435 = vunpack.c.l.b16 %v225
      %v436 = vunpack.c.l.b16 %v226
      %v437 = vunpack.c.h.b16 %v226
      %v438 = vunpack.c.l.b16 %v227
      %v439 = vunpack.c.l.b16 %v228
      %v440 = vunpack.c.h.b16 %v228
      %v441 = vunpack.c.l.b16 %v229
      %v442 = vunpack.c.l.b16 %v230
      %v443 = vunpack.c.h.b16 %v230
      %v444 = vunpack.c.l.b16 %v231
      %v445 = vunpack.c.l.b16 %v232
      %v446 = vunpack.c.h.b16 %v232
      %v447 = vunpack.c.l.b16 %v233
      %v448 = vunpack.c.l.b16 %v234
      %v449 = vunpack.c.h.b16 %v234
      %v450 = vunpack.c.l.b16 %v235
      %v451 = vpack.c.b16 %v358, %v355
      %v452 = vpack.c.b16 %v359, %v356
      %v453 = vpack.c.b16 %v360, %v357
      %v454 = vpack.c.b16 %v364, %v361
      %v455 = vpack.c.b16 %v365, %v362
      %v456 = vpack.c.b16 %v366, %v363
      %v457 = vpack.c.b16 %v370, %v367
      %v458 = vpack.c.b16 %v371, %v368
      %v459 = vpack.c.b16 %v372, %v369
      %v460 = vpack.c.b16 %v376, %v373
      %v461 = vpack.c.b16 %v377, %v374
      %v462 = vpack.c.b16 %v378, %v375
      %v463 = vpack.c.b16 %v382, %v379
      %v464 = vpack.c.b16 %v383, %v380
      %v465 = vpack.c.b16 %v384, %v381
      %v466 = vpack.c.b16 %v388, %v385
      %v467 = vpack.c.b16 %v389, %v386
      %v468 = vpack.c.b16 %v390, %v387
      %v469 = vpack.c.b16 %v394, %v391
      %v470 = vpack.c.b16 %v395, %v392
      %v471 = vpack.c.b16 %v396, %v393
      %v472 = vpack.c.b16 %v400, %v397
      %v473 = vpack.c.b16 %v401, %v398
      %v474 = vpack.c.b16 %v402, %v399
      %v475 = vpack.c.b16 %v406, %v403
      %v476 = vpack.c.b16 %v407, %v404
      %v477 = vpack.c.b16 %v408, %v405
      %v478 = vpack.c.b16 %v412, %v409
      %v479 = vpack.c.b16 %v413, %v410
      %v480 = vpack.c.b16 %v414, %v411
      %v481 = vpack.c.b16 %v418, %v415
      %v482 = vpack.c.b16 %v419, %v416
      %v483 = vpack.c.b16 %v420, %v417
      %v484 = vpack.c.b16 %v424, %v421
      %v485 = vpack.c.b16 %v425, %v422
      %v486 = vpack.c.b16 %v426, %v423
      %v487 = vpack.c.b16 %v430, %v427
      %v488 = vpack.c.b16 %v431, %v428
      %v489 = vpack.c.b16 %v432, %v429
      %v490 = vpack.c.b16 %v436, %v433
      %v491 = vpack.c.b16 %v437, %v434
      %v492 = vpack.c.b16 %v438, %v435
      %v493 = vpack.c.b16 %v442, %v439
      %v494 = vpack.c.b16 %v443, %v440
      %v495 = vpack.c.b16 %v444, %v441
      %v496 = vpack.c.b16 %v448, %v445
      %v497 = vpack.c.b16 %v449, %v446
      %v498 = vpack.c.b16 %v450, %v447
      %v595 = vunpack.c.l.b16 %v236
      %v596 = vunpack.c.l.b16 %v237
      %v597 = vunpack.c.l.b16 %v238
      %v598 = vunpack.c.l.b16 %v239
      %v599 = vunpack.c.l.b16 %v240
      %v600 = vunpack.c.l.b16 %v241
      %v601 = vunpack.c.l.b16 %v242
      %v602 = vunpack.c.l.b16 %v243
      %v603 = vunpack.c.l.b16 %v244
      %v604 = vunpack.c.l.b16 %v245
      %v605 = vunpack.c.l.b16 %v246
      %v606 = vunpack.c.l.b16 %v247
      %v607 = vunpack.c.l.b16 %v248
      %v608 = vunpack.c.l.b16 %v249
      %v609 = vunpack.c.l.b16 %v250
      %v610 = vunpack.c.l.b16 %v251
      %v611 = vunpack.c.l.b16 %v252
      %v612 = vunpack.c.l.b16 %v253
      %v613 = vunpack.c.l.b16 %v254
      %v614 = vunpack.c.l.b16 %v255
      %v615 = vunpack.c.l.b16 %v256
      %v616 = vunpack.c.l.b16 %v257
      %v617 = vunpack.c.l.b16 %v258
      %v618 = vunpack.c.l.b16 %v259
      %v619 = vunpack.c.l.b16 %v260
      %v620 = vunpack.c.l.b16 %v261
      %v621 = vunpack.c.l.b16 %v262
      %v622 = vunpack.c.l.b16 %v263
      %v623 = vunpack.c.l.b16 %v264
      %v624 = vunpack.c.l.b16 %v265
      %v625 = vunpack.c.l.b16 %v266
      %v626 = vunpack.c.l.b16 %v267
      %v627 = vunpack.c.l.b16 %v268
      %v628 = vunpack.c.l.b16 %v269
      %v629 = vunpack.c.l.b16 %v270
      %v630 = vunpack.c.l.b16 %v271
      %v631 = vunpack.c.l.b16 %v272
      %v632 = vunpack.c.l.b16 %v273
      %v633 = vunpack.c.l.b16 %v274
      %v634 = vunpack.c.l.b16 %v275
      %v635 = vunpack.c.l.b16 %v276
      %v636 = vunpack.c.l.b16 %v277
      %v637 = vunpack.c.l.b16 %v278
      %v638 = vunpack.c.l.b16 %v279
      %v639 = vunpack.c.l.b16 %v280
      %v640 = vunpack.c.l.b16 %v281
      %v641 = vunpack.c.l.b16 %v282
      %v642 = vunpack.c.l.b16 %v283
      %v643 = vpack.c.b16 %v596, %v595
      %v644 = vpack.c.b16 %v598, %v597
      %v645 = vpack.c.b16 %v600, %v599
      %v646 = vpack.c.b16 %v602, %v601
      %v647 = vpack.c.b16 %v604, %v603
      %v648 = vpack.c.b16 %v606, %v605
      %v649 = vpack.c.b16 %v608, %v607
      %v650 = vpack.c.b16 %v610, %v609
      %v651 = vpack.c.b16 %v612, %v611
      %v652 = vpack.c.b16 %v614, %v613
      %v653 = vpack.c.b16 %v616, %v615
      %v654 = vpack.c.b16 %v618, %v617
      %v655 = vpack.c.b16 %v620, %v619
      %v656 = vpack.c.b16 %v622, %v621
      %v657 = vpack.c.b16 %v624, %v623
      %v658 = vpack.c.b16 %v626, %v625
      %v659 = vpack.c.b16 %v628, %v627
      %v660 = vpack.c.b16 %v630, %v629
      %v661 = vpack.c.b16 %v632, %v631
      %v662 = vpack.c.b16 %v634, %v633
      %v663 = vpack.c.b16 %v636, %v635
      %v664 = vpack.c.b16 %v638, %v637
      %v665 = vpack.c.b16 %v640, %v639
      %v666 = vpack.c.b16 %v642, %v641
      %691 = vmatprep.subr.bf16.mxu0 0
      %692 = vmatpush1.bf16.msra.mxu0 %v643
      %693 = vmatprep.subr.bf16.mxu0 0
      %694 = vmatpush1.bf16.msra.mxu0 %v644
      %695 = vmatprep.subr.bf16.mxu0 0
      %696 = vmatpush1.bf16.msra.mxu0 %v645
      %697 = vmatprep.subr.bf16.mxu0 0
      %698 = vmatpush1.bf16.msra.mxu0 %v646
      %699 = vmatprep.subr.bf16.mxu0 0
      %700 = vmatpush1.bf16.msra.mxu0 %v647
      %701 = vmatprep.subr.bf16.mxu0 0
      %702 = vmatpush1.bf16.msra.mxu0 %v648
      %703 = vmatprep.subr.bf16.mxu0 0
      %704 = vmatpush1.bf16.msra.mxu0 %v649
      %705 = vmatprep.subr.bf16.mxu0 0
      %706 = vmatpush1.bf16.msra.mxu0 %v650
      %707 = vmatprep.subr.bf16.mxu0 0
      %708 = vmatpush1.bf16.msra.mxu0 %v651
      %709 = vmatprep.subr.bf16.mxu0 0
      %710 = vmatpush1.bf16.msra.mxu0 %v652
      %711 = vmatprep.subr.bf16.mxu0 0
      %712 = vmatpush1.bf16.msra.mxu0 %v653
      %713 = vmatprep.subr.bf16.mxu0 0
      %714 = vmatpush1.bf16.msra.mxu0 %v654
      %715 = vmatprep.subr.bf16.mxu0 0
      %716 = vmatpush1.bf16.msra.mxu0 %v655
      %717 = vmatprep.subr.bf16.mxu0 0
      %718 = vmatpush1.bf16.msra.mxu0 %v656
      %719 = vmatprep.subr.bf16.mxu0 0
      %720 = vmatpush1.bf16.msra.mxu0 %v657
      %721 = vmatprep.subr.bf16.mxu0 0
      %722 = vmatpush1.bf16.msra.mxu0 %v658
      %723 = vmatprep.mubr.bf16.mxu0 %v452
      %724 = vmatmul.mubr.bf16.gmra.mrb[0].mxu0 %v451
      %v725 = vpop.f32.mrb[0].mxu0
      %v726 = vadd.f32 %v289, %v725
      %v727 = vpop.f32.mrb[0].mxu0
      %v728 = vpop.f32.mrb[0].mxu0
      %v729 = vadd.f32 %v289, %v728
      %v730 = vpop.f32.mrb[0].mxu0
      %731 = vmatprep.mubr.bf16.mxu0 %v455
      %732 = vmatmul.mubr.bf16.gmra.mrb[0].mxu0 %v454
      %v733 = vpop.f32.mrb[0].mxu0
      %v734 = vadd.f32 %v289, %v733
      %v735 = vpop.f32.mrb[0].mxu0
      %v736 = vpop.f32.mrb[0].mxu0
      %v737 = vadd.f32 %v289, %v736
      %v738 = vpop.f32.mrb[0].mxu0
      %739 = vmatprep.mubr.bf16.mxu0 %v458
      %740 = vmatmul.mubr.bf16.gmra.mrb[0].mxu0 %v457
      %v741 = vpop.f32.mrb[0].mxu0
      %v742 = vadd.f32 %v289, %v741
      %v743 = vpop.f32.mrb[0].mxu0
      %v744 = vpop.f32.mrb[0].mxu0
      %v745 = vadd.f32 %v289, %v744
      %v746 = vpop.f32.mrb[0].mxu0
      %747 = vmatprep.mubr.bf16.mxu0 %v461
      %748 = vmatmul.mubr.bf16.gmra.mrb[0].mxu0 %v460
      %v749 = vpop.f32.mrb[0].mxu0
      %v750 = vadd.f32 %v289, %v749
      %v751 = vpop.f32.mrb[0].mxu0
      %v752 = vpop.f32.mrb[0].mxu0
      %v753 = vadd.f32 %v289, %v752
      %v754 = vpop.f32.mrb[0].mxu0
      %755 = vmatprep.mubr.bf16.mxu0 %v464
      %756 = vmatmul.mubr.bf16.gmra.mrb[0].mxu0 %v463
      %v757 = vpop.f32.mrb[0].mxu0
      %v758 = vadd.f32 %v289, %v757
      %v759 = vpop.f32.mrb[0].mxu0
      %v760 = vpop.f32.mrb[0].mxu0
      %v761 = vadd.f32 %v289, %v760
      %v762 = vpop.f32.mrb[0].mxu0
      %763 = vmatprep.mubr.bf16.mxu0 %v467
      %764 = vmatmul.mubr.bf16.gmra.mrb[0].mxu0 %v466
      %v765 = vpop.f32.mrb[0].mxu0
      %v766 = vadd.f32 %v289, %v765
      %v767 = vpop.f32.mrb[0].mxu0
      %v768 = vpop.f32.mrb[0].mxu0
      %v769 = vadd.f32 %v289, %v768
      %v770 = vpop.f32.mrb[0].mxu0
      %771 = vmatprep.mubr.bf16.mxu0 %v470
      %772 = vmatmul.mubr.bf16.gmra.mrb[0].mxu0 %v469
      %v773 = vpop.f32.mrb[0].mxu0
      %v774 = vadd.f32 %v289, %v773
      %v775 = vpop.f32.mrb[0].mxu0
      %v776 = vpop.f32.mrb[0].mxu0
      %v777 = vadd.f32 %v289, %v776
      %v778 = vpop.f32.mrb[0].mxu0
      %779 = vmatprep.mubr.bf16.mxu0 %v473
      %780 = vmatmul.mubr.bf16.gmra.mrb[0].mxu0 %v472
      %v781 = vpop.f32.mrb[0].mxu0
      %v782 = vadd.f32 %v289, %v781
      %v783 = vpop.f32.mrb[0].mxu0
      %v784 = vpop.f32.mrb[0].mxu0
      %v785 = vadd.f32 %v289, %v784
      %v786 = vpop.f32.mrb[0].mxu0
      %787 = vmatprep.mubr.bf16.mxu0 %v476
      %788 = vmatmul.mubr.bf16.gmra.mrb[0].mxu0 %v475
      %v789 = vpop.f32.mrb[0].mxu0
      %v790 = vadd.f32 %v289, %v789
      %v791 = vpop.f32.mrb[0].mxu0
      %v792 = vpop.f32.mrb[0].mxu0
      %v793 = vadd.f32 %v289, %v792
      %v794 = vpop.f32.mrb[0].mxu0
      %795 = vmatprep.mubr.bf16.mxu0 %v479
      %796 = vmatmul.mubr.bf16.gmra.mrb[0].mxu0 %v478
      %v797 = vpop.f32.mrb[0].mxu0
      %v798 = vadd.f32 %v289, %v797
      %v799 = vpop.f32.mrb[0].mxu0
      %v800 = vpop.f32.mrb[0].mxu0
      %v801 = vadd.f32 %v289, %v800
      %v802 = vpop.f32.mrb[0].mxu0
      %803 = vmatprep.mubr.bf16.mxu0 %v482
      %804 = vmatmul.mubr.bf16.gmra.mrb[0].mxu0 %v481
      %v805 = vpop.f32.mrb[0].mxu0
      %v806 = vadd.f32 %v289, %v805
      %v807 = vpop.f32.mrb[0].mxu0
      %v808 = vpop.f32.mrb[0].mxu0
      %v809 = vadd.f32 %v289, %v808
      %v810 = vpop.f32.mrb[0].mxu0
      %811 = vmatprep.mubr.bf16.mxu0 %v485
      %812 = vmatmul.mubr.bf16.gmra.mrb[0].mxu0 %v484
      %v813 = vpop.f32.mrb[0].mxu0
      %v814 = vadd.f32 %v289, %v813
      %v815 = vpop.f32.mrb[0].mxu0
      %v816 = vpop.f32.mrb[0].mxu0
      %v817 = vadd.f32 %v289, %v816
      %v818 = vpop.f32.mrb[0].mxu0
      %819 = vmatprep.mubr.bf16.mxu0 %v488
      %820 = vmatmul.mubr.bf16.gmra.mrb[0].mxu0 %v487
      %v821 = vpop.f32.mrb[0].mxu0
      %v822 = vadd.f32 %v289, %v821
      %v823 = vpop.f32.mrb[0].mxu0
      %v824 = vpop.f32.mrb[0].mxu0
      %v825 = vadd.f32 %v289, %v824
      %v826 = vpop.f32.mrb[0].mxu0
      %827 = vmatprep.mubr.bf16.mxu0 %v491
      %828 = vmatmul.mubr.bf16.gmra.mrb[0].mxu0 %v490
      %v829 = vpop.f32.mrb[0].mxu0
      %v830 = vadd.f32 %v289, %v829
      %v831 = vpop.f32.mrb[0].mxu0
      %v832 = vpop.f32.mrb[0].mxu0
      %v833 = vadd.f32 %v289, %v832
      %v834 = vpop.f32.mrb[0].mxu0
      %835 = vmatprep.mubr.bf16.mxu0 %v494
      %836 = vmatmul.mubr.bf16.gmra.mrb[0].mxu0 %v493
      %v837 = vpop.f32.mrb[0].mxu0
      %v838 = vadd.f32 %v289, %v837
      %v839 = vpop.f32.mrb[0].mxu0
      %v840 = vpop.f32.mrb[0].mxu0
      %v841 = vadd.f32 %v289, %v840
      %v842 = vpop.f32.mrb[0].mxu0
      %843 = vmatprep.mubr.bf16.mxu0 %v497
      %844 = vmatmul.mubr.bf16.gmra.mrb[0].mxu0 %v496
      %v845 = vpop.f32.mrb[0].mxu0
      %v846 = vadd.f32 %v289, %v845
      %v847 = vpop.f32.mrb[0].mxu0
      %v848 = vpop.f32.mrb[0].mxu0
      %v849 = vadd.f32 %v289, %v848
      %v850 = vpop.f32.mrb[0].mxu0
      %851 = vdwg.mxu0
      %852 = vmatprep.subr.bf16.mxu0 0
      %853 = vmatpush1.bf16.msra.mxu0 %v659
      %854 = vmatprep.subr.bf16.mxu0 0
      %855 = vmatpush1.bf16.msra.mxu0 %v660
      %856 = vmatprep.subr.bf16.mxu0 0
      %857 = vmatpush1.bf16.msra.mxu0 %v661
      %858 = vmatprep.subr.bf16.mxu0 0
      %859 = vmatpush1.bf16.msra.mxu0 %v662
      %860 = vmatprep.subr.bf16.mxu0 0
      %861 = vmatpush1.bf16.msra.mxu0 %v663
      %862 = vmatprep.subr.bf16.mxu0 0
      %863 = vmatpush1.bf16.msra.mxu0 %v664
      %864 = vmatprep.subr.bf16.mxu0 0
      %865 = vmatpush1.bf16.msra.mxu0 %v665
      %866 = vmatprep.subr.bf16.mxu0 0
      %867 = vmatpush1.bf16.msra.mxu0 %v666
      %868 = vmatprep.subr.bf16.mxu0 0
      %869 = vmatpush1.bf16.msra.mxu0 0
      %870 = vmatprep.subr.bf16.mxu0 0
      %871 = vmatpush1.bf16.msra.mxu0 0
      %872 = vmatprep.subr.bf16.mxu0 0
      %873 = vmatpush1.bf16.msra.mxu0 0
      %874 = vmatprep.subr.bf16.mxu0 0
      %875 = vmatpush1.bf16.msra.mxu0 0
      %876 = vmatprep.subr.bf16.mxu0 0
      %877 = vmatpush1.bf16.msra.mxu0 0
      %878 = vmatprep.subr.bf16.mxu0 0
      %879 = vmatpush1.bf16.msra.mxu0 0
      %880 = vmatprep.subr.bf16.mxu0 0
      %881 = vmatpush1.bf16.msra.mxu0 0
      %882 = vmatprep.subr.bf16.mxu0 0
      %883 = vmatpush1.bf16.msra.mxu0 0
      %884 = vmatprep.mubr.bf16.mxu0 0
      %885 = vmatmul.mubr.bf16.gmra.mrb[0].mxu0 %v453
      %v886 = vpop.f32.mrb[0].mxu0
      %v887 = vadd.f32 %v726, %v886
      %v888 = vpop.f32.mrb[0].mxu0
      %v889 = vpop.f32.mrb[0].mxu0
      %v890 = vadd.f32 %v729, %v889
      %v891 = vpop.f32.mrb[0].mxu0
      %892 = vmatprep.mubr.bf16.mxu0 0
      %893 = vmatmul.mubr.bf16.gmra.mrb[0].mxu0 %v456
      %v894 = vpop.f32.mrb[0].mxu0
      %v895 = vadd.f32 %v734, %v894
      %v896 = vpop.f32.mrb[0].mxu0
      %v897 = vpop.f32.mrb[0].mxu0
      %v898 = vadd.f32 %v737, %v897
      %v899 = vpop.f32.mrb[0].mxu0
      %900 = vmatprep.mubr.bf16.mxu0 0
      %901 = vmatmul.mubr.bf16.gmra.mrb[0].mxu0 %v459
      %v902 = vpop.f32.mrb[0].mxu0
      %v903 = vadd.f32 %v742, %v902
      %v904 = vpop.f32.mrb[0].mxu0
      %v905 = vpop.f32.mrb[0].mxu0
      %v906 = vadd.f32 %v745, %v905
      %v907 = vpop.f32.mrb[0].mxu0
      %908 = vmatprep.mubr.bf16.mxu0 0
      %909 = vmatmul.mubr.bf16.gmra.mrb[0].mxu0 %v462
      %v910 = vpop.f32.mrb[0].mxu0
      %v911 = vadd.f32 %v750, %v910
      %v912 = vpop.f32.mrb[0].mxu0
      %v913 = vpop.f32.mrb[0].mxu0
      %v914 = vadd.f32 %v753, %v913
      %v915 = vpop.f32.mrb[0].mxu0
      %916 = vmatprep.mubr.bf16.mxu0 0
      %917 = vmatmul.mubr.bf16.gmra.mrb[0].mxu0 %v465
      %v918 = vpop.f32.mrb[0].mxu0
      %v919 = vadd.f32 %v758, %v918
      %v920 = vpop.f32.mrb[0].mxu0
      %v921 = vpop.f32.mrb[0].mxu0
      %v922 = vadd.f32 %v761, %v921
      %v923 = vpop.f32.mrb[0].mxu0
      %924 = vmatprep.mubr.bf16.mxu0 0
      %925 = vmatmul.mubr.bf16.gmra.mrb[0].mxu0 %v468
      %v926 = vpop.f32.mrb[0].mxu0
      %v927 = vadd.f32 %v766, %v926
      %v928 = vpop.f32.mrb[0].mxu0
      %v929 = vpop.f32.mrb[0].mxu0
      %v930 = vadd.f32 %v769, %v929
      %v931 = vpop.f32.mrb[0].mxu0
      %932 = vmatprep.mubr.bf16.mxu0 0
      %933 = vmatmul.mubr.bf16.gmra.mrb[0].mxu0 %v471
      %v934 = vpop.f32.mrb[0].mxu0
      %v935 = vadd.f32 %v774, %v934
      %v936 = vpop.f32.mrb[0].mxu0
      %v937 = vpop.f32.mrb[0].mxu0
      %v938 = vadd.f32 %v777, %v937
      %v939 = vpop.f32.mrb[0].mxu0
      %940 = vmatprep.mubr.bf16.mxu0 0
      %941 = vmatmul.mubr.bf16.gmra.mrb[0].mxu0 %v474
      %v942 = vpop.f32.mrb[0].mxu0
      %v943 = vadd.f32 %v782, %v942
      %v944 = vpop.f32.mrb[0].mxu0
      %v945 = vpop.f32.mrb[0].mxu0
      %v946 = vadd.f32 %v785, %v945
      %v947 = vpop.f32.mrb[0].mxu0
      %948 = vmatprep.mubr.bf16.mxu0 0
      %949 = vmatmul.mubr.bf16.gmra.mrb[0].mxu0 %v477
      %v950 = vpop.f32.mrb[0].mxu0
      %v951 = vadd.f32 %v790, %v950
      %v952 = vpop.f32.mrb[0].mxu0
      %v953 = vpop.f32.mrb[0].mxu0
      %v954 = vadd.f32 %v793, %v953
      %v955 = vpop.f32.mrb[0].mxu0
      %956 = vmatprep.mubr.bf16.mxu0 0
      %957 = vmatmul.mubr.bf16.gmra.mrb[0].mxu0 %v480
      %v958 = vpop.f32.mrb[0].mxu0
      %v959 = vadd.f32 %v798, %v958
      %v960 = vpop.f32.mrb[0].mxu0
      %v961 = vpop.f32.mrb[0].mxu0
      %v962 = vadd.f32 %v801, %v961
      %v963 = vpop.f32.mrb[0].mxu0
      %964 = vmatprep.mubr.bf16.mxu0 0
      %965 = vmatmul.mubr.bf16.gmra.mrb[0].mxu0 %v483
      %v966 = vpop.f32.mrb[0].mxu0
      %v967 = vadd.f32 %v806, %v966
      %v968 = vpop.f32.mrb[0].mxu0
      %v969 = vpop.f32.mrb[0].mxu0
      %v970 = vadd.f32 %v809, %v969
      %v971 = vpop.f32.mrb[0].mxu0
      %972 = vmatprep.mubr.bf16.mxu0 0
      %973 = vmatmul.mubr.bf16.gmra.mrb[0].mxu0 %v486
      %v974 = vpop.f32.mrb[0].mxu0
      %v975 = vadd.f32 %v814, %v974
      %v976 = vpop.f32.mrb[0].mxu0
      %v977 = vpop.f32.mrb[0].mxu0
      %v978 = vadd.f32 %v817, %v977
      %v979 = vpop.f32.mrb[0].mxu0
      %980 = vmatprep.mubr.bf16.mxu0 0
      %981 = vmatmul.mubr.bf16.gmra.mrb[0].mxu0 %v489
      %v982 = vpop.f32.mrb[0].mxu0
      %v983 = vadd.f32 %v822, %v982
      %v984 = vpop.f32.mrb[0].mxu0
      %v985 = vpop.f32.mrb[0].mxu0
      %v986 = vadd.f32 %v825, %v985
      %v987 = vpop.f32.mrb[0].mxu0
      %988 = vmatprep.mubr.bf16.mxu0 0
      %989 = vmatmul.mubr.bf16.gmra.mrb[0].mxu0 %v492
      %v990 = vpop.f32.mrb[0].mxu0
      %v991 = vadd.f32 %v830, %v990
      %v992 = vpop.f32.mrb[0].mxu0
      %v993 = vpop.f32.mrb[0].mxu0
      %v994 = vadd.f32 %v833, %v993
      %v995 = vpop.f32.mrb[0].mxu0
      %996 = vmatprep.mubr.bf16.mxu0 0
      %997 = vmatmul.mubr.bf16.gmra.mrb[0].mxu0 %v495
      %v998 = vpop.f32.mrb[0].mxu0
      %v999 = vadd.f32 %v838, %v998
      %v1000 = vpop.f32.mrb[0].mxu0
      %v1001 = vpop.f32.mrb[0].mxu0
      %v1002 = vadd.f32 %v841, %v1001
      %v1003 = vpop.f32.mrb[0].mxu0
      %1004 = vmatprep.mubr.bf16.mxu0 0
      %1005 = vmatmul.mubr.bf16.gmra.mrb[0].mxu0 %v498
      %v1006 = vpop.f32.mrb[0].mxu0
      %v1007 = vadd.f32 %v846, %v1006
      %v1008 = vpop.f32.mrb[0].mxu0
      %v1009 = vpop.f32.mrb[0].mxu0
      %v1010 = vadd.f32 %v849, %v1009
      %v1011 = vpop.f32.mrb[0].mxu0
      %1012 = vdwg.mxu0
      %1013 = vst [vmem:[%s170] sm:$0xff] %v887
      %1014 = vst [vmem:[%s170 + $0x8] sm:$0xff] %v890
      %1015 = vst [vmem:[%s170 + $0x10] sm:$0xff] %v895
      %1016 = vst [vmem:[%s170 + $0x18] sm:$0xff] %v898
      %1017 = vst [vmem:[%s170 + $0x20] sm:$0xff] %v903
      %1018 = vst [vmem:[%s170 + $0x28] sm:$0xff] %v906
      %1019 = vst [vmem:[%s170 + $0x30] sm:$0xff] %v911
      %1020 = vst [vmem:[%s170 + $0x38] sm:$0xff] %v914
      %1021 = vst [vmem:[%s170 + $0x40] sm:$0xff] %v919
      %1022 = vst [vmem:[%s170 + $0x48] sm:$0xff] %v922
      %1023 = vst [vmem:[%s170 + $0x50] sm:$0xff] %v927
      %1024 = vst [vmem:[%s170 + $0x58] sm:$0xff] %v930
      %1025 = vst [vmem:[%s170 + $0x60] sm:$0xff] %v935
      %1026 = vst [vmem:[%s170 + $0x68] sm:$0xff] %v938
      %1027 = vst [vmem:[%s170 + $0x70] sm:$0xff] %v943
      %1028 = vst [vmem:[%s170 + $0x78] sm:$0xff] %v946
      %1029 = vst [vmem:[%s170 + $0x80] sm:$0xff] %v951
      %1030 = vst [vmem:[%s170 + $0x88] sm:$0xff] %v954
      %1031 = vst [vmem:[%s170 + $0x90] sm:$0xff] %v959
      %1032 = vst [vmem:[%s170 + $0x98] sm:$0xff] %v962
      %1033 = vst [vmem:[%s170 + $0xa0] sm:$0xff] %v967
      %1034 = vst [vmem:[%s170 + $0xa8] sm:$0xff] %v970
      %1035 = vst [vmem:[%s170 + $0xb0] sm:$0xff] %v975
      %1036 = vst [vmem:[%s170 + $0xb8] sm:$0xff] %v978
      %1037 = vst [vmem:[%s170 + $0xc0] sm:$0xff] %v983
      %1038 = vst [vmem:[%s170 + $0xc8] sm:$0xff] %v986
      %1039 = vst [vmem:[%s170 + $0xd0] sm:$0xff] %v991
      %1040 = vst [vmem:[%s170 + $0xd8] sm:$0xff] %v994
      %1041 = vst [vmem:[%s170 + $0xe0] sm:$0xff] %v999
      %1042 = vst [vmem:[%s170 + $0xe8] sm:$0xff] %v1002
      %1043 = vst [vmem:[%s170 + $0xf0] sm:$0xff] %v1007
      %1044 = vst [vmem:[%s170 + $0xf8] sm:$0xff] %v1010
      %p1045 = scmp.lt.s32.totalorder %s14, 1
      %s1046 = scalar_select %p1045, %s14, 1
      %s1047 = smul.addr %s1046, 32
      %s1048 = smul.addr %s1047, 8
      %s1049 = scalar_lea.vmem %s3, %s1048
      // Predicated region
      $region33: #{masknet_forward.5} parent=31 // pred_check
        %p1050 = pneg %p100
      $region34: #{masknet_forward.5} parent=31 // pred_check_branch
        %1052 = sbr.rel (%p1050) target = $region36
      $region35: #{masknet_forward.5} parent=31 // pred_region
        _
      $region36: #{masknet_forward.5} parent=31 // pred_fallthru
        _
    $region32: #{masknet_forward.5} parent=5 // pred_fallthru
      _
    %p1053 = scmp.le.s32.totalorder 2, %s9
    // Predicated region
    $region37: #{masknet_forward.5} parent=5 // pred_check
      %p1054 = pneg %p1053
    $region38: #{masknet_forward.5} parent=5 // pred_check_branch
      %1056 = sbr.rel (%p1054) target = $region40
    $region39: #{masknet_forward.5} parent=5 // pred_region
      %s1057 = ssub.s32 %s9, 2
      // Predicated region
      $region41: #{masknet_forward.5} parent=39 // pred_check
        %p1058 = pneg %p106
      $region42: #{masknet_forward.5} parent=39 // pred_check_branch
        %1060 = sbr.rel (%p1058) target = $region44
      $region43: #{masknet_forward.5} parent=39 // pred_region
        %p1061 = scmp.lt.s32.totalorder %s15, 1
        %s1062 = scalar_select %p1061, %s15, 1
        %s1063 = smul.addr %s1062, 32
        %s1064 = smul.addr %s1063, 8
        %s1065 = scalar_lea.vmem %s3, %s1064
      $region44: #{masknet_forward.5} parent=39 // pred_fallthru
        _
    $region40: #{masknet_forward.5} parent=5 // pred_fallthru
      _
  $region6: #{masknet_forward.5} parent=0 // loop_footer
    %s13 = sadd.s32 1, %s9
  $region7: #{masknet_forward.5} parent=0 // loop_footer_branch
    %8 = sbr.rel target = $region3
  $region8: #{masknet_forward.5} parent=0 // loop_exit
    _

</llo_original>
